<compile_context>
chip_gen: v7x
topology: tpu7x:2x2x1
jax: 0.10.0
libtpu: 0.0.40
codegen_flags: <defaults>
</compile_context>

<pallas_src>
import jax
import jax.numpy as jnp
from jax import lax
from jax.experimental import pallas as pl
from jax.experimental.pallas import tpu as pltpu

# ---- M6ANet default hyper-parameters -----------------------------------
C_IN = 6            # input channels
L_IN = 15           # sequence length (input_example=(1, 6, 15))
C1, K1 = 30, 5      # conv_1
C2, K2 = 10, 5      # conv_2
C3, K3 = 5, 3       # conv_3
L1 = L_IN - K1 + 1  # 11
L2 = L1 - K2 + 1    # 7
L3 = L2 - K3 + 1    # 5
F_IN = C_IN * L_IN  # 90
F1 = C1 * L1        # 330
F2 = C2 * L2        # 70
FLAT = C3 * L3      # 25 == sec_last_layer_size
H = 5               # last_layer_size
OUT = 2             # output_shape


# ------------------------------ kernel ----------------------------------
def m6anet_kernel(x_ref, m1_ref, b1_ref, m2_ref, b2_ref, m3_ref, b3_ref,
                  wl_ref, bl_ref, wo_ref, bo_ref, out_ref):
    # x_ref block: (F_IN, TB) float32 -- batch on the 128-lane axis.
    x = x_ref[...]

    def dense_relu(w_ref, b_ref, a):
        y = jnp.dot(w_ref[...], a, preferred_element_type=jnp.float32)
        return jnp.maximum(y + b_ref[...], 0.0)

    a1 = dense_relu(m1_ref, b1_ref, x)    # (F1, TB)    conv_1 + relu
    a2 = dense_relu(m2_ref, b2_ref, a1)   # (F2, TB)    conv_2 + relu
    a3 = dense_relu(m3_ref, b3_ref, a2)   # (FLAT, TB)  conv_3 + relu (torch-flatten order)
    h = dense_relu(wl_ref, bl_ref, a3)    # (H, TB)     linear + relu
    logits = jnp.dot(wo_ref[...], h,
                     preferred_element_type=jnp.float32) + bo_ref[...]  # (OUT, TB)

    # softmax over the class axis (axis 0, size 2, lives on sublanes)
    m = jnp.max(logits, axis=0, keepdims=True)
    e = jnp.exp(logits - m)
    out_ref[...] = e / jnp.sum(e, axis=0, keepdims=True)


# --------------------- wrapper-side weight plumbing ----------------------
def _conv_to_dense(w, l_in):
    """Fold a Conv1d weight (C_out, C_in, K) into a dense block-Toeplitz
    matrix M of shape (C_out*L_out, C_in*L_in) with
        M[co*L_out + t, ci*L_in + l] = w[co, ci, l - t]   if 0 <= l-t < K else 0
    so that y_flat = M @ x_flat reproduces the 'valid' conv exactly."""
    c_out, c_in, k = w.shape
    l_out = l_in - k + 1
    rows = jnp.arange(l_out)[:, None]          # (L_out, 1)
    cols = jnp.arange(l_in)[None, :]           # (1, L_in)
    diff = cols - rows                         # (L_out, L_in)
    mask = ((diff >= 0) & (diff < k)).astype(jnp.float32)
    tap = jnp.clip(diff, 0, k - 1)
    blk = w[:, :, tap] * mask[None, None]      # (C_out, C_in, L_out, L_in)
    return jnp.transpose(blk, (0, 2, 1, 3)).reshape(c_out * l_out, c_in * l_in)


def m6anet_forward(x_ncl, params, tb=512):
    """x_ncl: (N, 6, 15) float32, same NCL layout as the PyTorch module."""
    w1, b1, w2, b2, w3, b3, wl, bl, wo, bo = params
    N = x_ncl.shape[0]

    # batch tile: multiple of 128, no bigger than the (padded) problem size.
    tb = max(128, min(int(tb), -(-N // 128) * 128))
    tb = (tb // 128) * 128
    n_pad = -(-N // tb) * tb

    # --- layout plumbing (one-time weight folding, no per-sample compute) --
    # input: NCL -> channel-major flat (ci*L_IN + l) -> batch on lanes
    x_t = x_ncl.astype(jnp.float32).reshape(N, F_IN).T          # (F_IN, N)
    if n_pad != N:
        x_t = jnp.pad(x_t, ((0, 0), (0, n_pad - N)))

    m1 = _conv_to_dense(w1.astype(jnp.float32), L_IN)           # (F1, F_IN)
    m2 = _conv_to_dense(w2.astype(jnp.float32), L1)             # (F2, F1)
    m3 = _conv_to_dense(w3.astype(jnp.float32), L2)             # (FLAT, F2)
    b1c = jnp.repeat(b1.astype(jnp.float32), L1).reshape(F1, 1)
    b2c = jnp.repeat(b2.astype(jnp.float32), L2).reshape(F2, 1)
    b3c = jnp.repeat(b3.astype(jnp.float32), L3).reshape(FLAT, 1)
    wlm = wl.astype(jnp.float32)                                 # (H, FLAT)
    blc = bl.astype(jnp.float32).reshape(H, 1)
    wom = wo.astype(jnp.float32)                                 # (OUT, H)
    boc = bo.astype(jnp.float32).reshape(OUT, 1)

    def full_spec(shape):
        return pl.BlockSpec(shape, lambda i, n=len(shape): (0,) * n)

    out_t = pl.pallas_call(
        m6anet_kernel,
        out_shape=jax.ShapeDtypeStruct((OUT, n_pad), jnp.float32),
        grid=(n_pad // tb,),
        in_specs=[
            pl.BlockSpec((F_IN, tb), lambda i: (0, i)),
            full_spec((F1, F_IN)),  full_spec((F1, 1)),
            full_spec((F2, F1)),    full_spec((F2, 1)),
            full_spec((FLAT, F2)),  full_spec((FLAT, 1)),
            full_spec((H, FLAT)),   full_spec((H, 1)),
            full_spec((OUT, H)),    full_spec((OUT, 1)),
        ],
        out_specs=pl.BlockSpec((OUT, tb), lambda i: (0, i)),
        compiler_params=pltpu.CompilerParams(
            dimension_semantics=("parallel",),
            vmem_limit_bytes=32 * 1024 * 1024),
    )(x_t, m1, b1c, m2, b2c, m3, b3c, wlm, blc, wom, boc)

    return out_t[:, :N].T     # back to (N, OUT); padded columns discarded


# -------------------- deterministic parameter init -----------------------
def init_params(key):
    """PyTorch-style uniform(-1/sqrt(fan_in), 1/sqrt(fan_in)) init."""
    ks = jax.random.split(key, 10)

    def u(k, shape, fan_in):
        bound = 1.0 / jnp.sqrt(fan_in)
        return jax.random.uniform(k, shape, jnp.float32, -bound, bound)

    w1 = u(ks[0], (C1, C_IN, K1), C_IN * K1); b1 = u(ks[1], (C1,), C_IN * K1)
    w2 = u(ks[2], (C2, C1, K2),  C1 * K2);    b2 = u(ks[3], (C2,), C1 * K2)
    w3 = u(ks[4], (C3, C2, K3),  C2 * K3);    b3 = u(ks[5], (C3,), C2 * K3)
    wl = u(ks[6], (H, FLAT), FLAT);           bl = u(ks[7], (H,), FLAT)
    wo = u(ks[8], (OUT, H), H);               bo = u(ks[9], (OUT,), H)
    return (w1, b1, w2, b2, w3, b3, wl, bl, wo, bo)


# ------------------------ pure-JAX reference ------------------------------
def m6anet_reference(x_ncl, params):
    w1, b1, w2, b2, w3, b3, wl, bl, wo, bo = params
    dn = ("NCH", "OIH", "NCH")

    def conv1d(x, w, b):
        y = lax.conv_general_dilated(x, w, (1,), "VALID", dimension_numbers=dn)
        return jnp.maximum(y + b[None, :, None], 0.0)

    a = conv1d(x_ncl, w1, b1)
    a = conv1d(a, w2, b2)
    a = conv1d(a, w3, b3)                      # (N, C3, L3), NCL
    flat = a.reshape(a.shape[0], -1)           # channel-major, like torch.flatten
    h = jnp.maximum(flat @ wl.T + bl, 0.0)
    logits = h @ wo.T + bo
    return jax.nn.softmax(logits, axis=1)


# ------------------------------- main -------------------------------------
if __name__ == "__main__":
    key = jax.random.PRNGKey(0)
    kx, kp = jax.random.split(key)
    params = init_params(kp)

    # (1) tiny batch (single grid step), (2) larger batch exercising padding
    # and a multi-step grid (tb=512 -> n_pad=1024, grid=2).
    for n in (4, 1000):
        x = jax.random.normal(jax.random.fold_in(kx, n),
                              (n, C_IN, L_IN), jnp.float32)   # NCL, torch-like
        y = jax.block_until_ready(m6anet_forward(x, params))
        y_ref = m6anet_reference(x, params)

        assert y.shape == (n, OUT)
        assert jnp.allclose(jnp.sum(y, axis=1), 1.0, atol=1e-5)
        err = jnp.max(jnp.abs(y - y_ref))
        assert jnp.allclose(y, y_ref, atol=1e-4, rtol=1e-4), (
            f"N={n}: max abs err {err}")

    print("KERNEL_OK")
</pallas_src>

<mosaic_0001>
module attributes {stable_mosaic.version = 11 : i64} {
  func.func @m6anet_kernel(%arg0: i32, %arg1: memref<90x128xf32, #tpu.memory_space<vmem>>, %arg2: memref<330x90xf32, #tpu.memory_space<vmem>>, %arg3: memref<330x1xf32, #tpu.memory_space<vmem>>, %arg4: memref<70x330xf32, #tpu.memory_space<vmem>>, %arg5: memref<70x1xf32, #tpu.memory_space<vmem>>, %arg6: memref<25x70xf32, #tpu.memory_space<vmem>>, %arg7: memref<25x1xf32, #tpu.memory_space<vmem>>, %arg8: memref<5x25xf32, #tpu.memory_space<vmem>>, %arg9: memref<5x1xf32, #tpu.memory_space<vmem>>, %arg10: memref<2x5xf32, #tpu.memory_space<vmem>>, %arg11: memref<2x1xf32, #tpu.memory_space<vmem>>, %arg12: memref<2x128xf32, #tpu.memory_space<vmem>>) attributes {dimension_semantics = [#tpu.dimension_semantics<parallel>], iteration_bounds = array<i64: 1>, scalar_prefetch = 0 : i64, scratch_operands = 0 : i64, tpu.core_type = #tpu.core_type<tc>, window_params = [{transform_indices = @transform_0, window_bounds = array<i64: 90, 128>}, {pipeline_mode = #tpu.pipeline_mode<synchronous>, transform_indices = @transform_1, window_bounds = array<i64: 330, 90>}, {pipeline_mode = #tpu.pipeline_mode<synchronous>, transform_indices = @transform_2, window_bounds = array<i64: 330, 1>}, {pipeline_mode = #tpu.pipeline_mode<synchronous>, transform_indices = @transform_3, window_bounds = array<i64: 70, 330>}, {pipeline_mode = #tpu.pipeline_mode<synchronous>, transform_indices = @transform_4, window_bounds = array<i64: 70, 1>}, {pipeline_mode = #tpu.pipeline_mode<synchronous>, transform_indices = @transform_5, window_bounds = array<i64: 25, 70>}, {pipeline_mode = #tpu.pipeline_mode<synchronous>, transform_indices = @transform_6, window_bounds = array<i64: 25, 1>}, {pipeline_mode = #tpu.pipeline_mode<synchronous>, transform_indices = @transform_7, window_bounds = array<i64: 5, 25>}, {pipeline_mode = #tpu.pipeline_mode<synchronous>, transform_indices = @transform_8, window_bounds = array<i64: 5, 1>}, {pipeline_mode = #tpu.pipeline_mode<synchronous>, transform_indices = @transform_9, window_bounds = array<i64: 2, 5>}, {pipeline_mode = #tpu.pipeline_mode<synchronous>, transform_indices = @transform_10, window_bounds = array<i64: 2, 1>}, {transform_indices = @transform_11, window_bounds = array<i64: 2, 128>}]} {
    %c0 = arith.constant 0 : index
    %c0_0 = arith.constant 0 : index
    %0 = vector.load %arg1[%c0, %c0_0] : memref<90x128xf32, #tpu.memory_space<vmem>>, vector<90x128xf32>
    %c0_1 = arith.constant 0 : index
    %c0_2 = arith.constant 0 : index
    %1 = vector.load %arg2[%c0_1, %c0_2] : memref<330x90xf32, #tpu.memory_space<vmem>>, vector<330x90xf32>
    %cst = arith.constant dense<0.000000e+00> : vector<330x128xf32>
    %2 = tpu.matmul %1, %0, %cst {dimension_numbers = #tpu.dot_dimension_numbers<[1], [0], [0], [1], [0, 0, 1, 1], [], []>} : vector<330x90xf32>, vector<90x128xf32>, vector<330x128xf32> -> vector<330x128xf32>
    %c0_3 = arith.constant 0 : index
    %c0_4 = arith.constant 0 : index
    %3 = vector.load %arg3[%c0_3, %c0_4] : memref<330x1xf32, #tpu.memory_space<vmem>>, vector<330x1xf32>
    %4 = vector.broadcast %3 : vector<330x1xf32> to vector<330x128xf32>
    %5 = arith.addf %2, %4 : vector<330x128xf32>
    %cst_5 = arith.constant 0.000000e+00 : f32
    %6 = vector.broadcast %cst_5 : f32 to vector<330x128xf32>
    %7 = arith.maximumf %5, %6 : vector<330x128xf32>
    %c0_6 = arith.constant 0 : index
    %c0_7 = arith.constant 0 : index
    %8 = vector.load %arg4[%c0_6, %c0_7] : memref<70x330xf32, #tpu.memory_space<vmem>>, vector<70x330xf32>
    %cst_8 = arith.constant dense<0.000000e+00> : vector<70x128xf32>
    %9 = tpu.matmul %8, %7, %cst_8 {dimension_numbers = #tpu.dot_dimension_numbers<[1], [0], [0], [1], [0, 0, 1, 1], [], []>} : vector<70x330xf32>, vector<330x128xf32>, vector<70x128xf32> -> vector<70x128xf32>
    %c0_9 = arith.constant 0 : index
    %c0_10 = arith.constant 0 : index
    %10 = vector.load %arg5[%c0_9, %c0_10] : memref<70x1xf32, #tpu.memory_space<vmem>>, vector<70x1xf32>
    %11 = vector.broadcast %10 : vector<70x1xf32> to vector<70x128xf32>
    %12 = arith.addf %9, %11 : vector<70x128xf32>
    %cst_11 = arith.constant 0.000000e+00 : f32
    %13 = vector.broadcast %cst_11 : f32 to vector<70x128xf32>
    %14 = arith.maximumf %12, %13 : vector<70x128xf32>
    %c0_12 = arith.constant 0 : index
    %c0_13 = arith.constant 0 : index
    %15 = vector.load %arg6[%c0_12, %c0_13] : memref<25x70xf32, #tpu.memory_space<vmem>>, vector<25x70xf32>
    %cst_14 = arith.constant dense<0.000000e+00> : vector<25x128xf32>
    %16 = tpu.matmul %15, %14, %cst_14 {dimension_numbers = #tpu.dot_dimension_numbers<[1], [0], [0], [1], [0, 0, 1, 1], [], []>} : vector<25x70xf32>, vector<70x128xf32>, vector<25x128xf32> -> vector<25x128xf32>
    %c0_15 = arith.constant 0 : index
    %c0_16 = arith.constant 0 : index
    %17 = vector.load %arg7[%c0_15, %c0_16] : memref<25x1xf32, #tpu.memory_space<vmem>>, vector<25x1xf32>
    %18 = vector.broadcast %17 : vector<25x1xf32> to vector<25x128xf32>
    %19 = arith.addf %16, %18 : vector<25x128xf32>
    %cst_17 = arith.constant 0.000000e+00 : f32
    %20 = vector.broadcast %cst_17 : f32 to vector<25x128xf32>
    %21 = arith.maximumf %19, %20 : vector<25x128xf32>
    %c0_18 = arith.constant 0 : index
    %c0_19 = arith.constant 0 : index
    %22 = vector.load %arg8[%c0_18, %c0_19] : memref<5x25xf32, #tpu.memory_space<vmem>>, vector<5x25xf32>
    %cst_20 = arith.constant dense<0.000000e+00> : vector<5x128xf32>
    %23 = tpu.matmul %22, %21, %cst_20 {dimension_numbers = #tpu.dot_dimension_numbers<[1], [0], [0], [1], [0, 0, 1, 1], [], []>} : vector<5x25xf32>, vector<25x128xf32>, vector<5x128xf32> -> vector<5x128xf32>
    %c0_21 = arith.constant 0 : index
    %c0_22 = arith.constant 0 : index
    %24 = vector.load %arg9[%c0_21, %c0_22] : memref<5x1xf32, #tpu.memory_space<vmem>>, vector<5x1xf32>
    %25 = vector.broadcast %24 : vector<5x1xf32> to vector<5x128xf32>
    %26 = arith.addf %23, %25 : vector<5x128xf32>
    %cst_23 = arith.constant 0.000000e+00 : f32
    %27 = vector.broadcast %cst_23 : f32 to vector<5x128xf32>
    %28 = arith.maximumf %26, %27 : vector<5x128xf32>
    %c0_24 = arith.constant 0 : index
    %c0_25 = arith.constant 0 : index
    %29 = vector.load %arg10[%c0_24, %c0_25] : memref<2x5xf32, #tpu.memory_space<vmem>>, vector<2x5xf32>
    %cst_26 = arith.constant dense<0.000000e+00> : vector<2x128xf32>
    %30 = tpu.matmul %29, %28, %cst_26 {dimension_numbers = #tpu.dot_dimension_numbers<[1], [0], [0], [1], [0, 0, 1, 1], [], []>} : vector<2x5xf32>, vector<5x128xf32>, vector<2x128xf32> -> vector<2x128xf32>
    %c0_27 = arith.constant 0 : index
    %c0_28 = arith.constant 0 : index
    %31 = vector.load %arg11[%c0_27, %c0_28] : memref<2x1xf32, #tpu.memory_space<vmem>>, vector<2x1xf32>
    %32 = vector.broadcast %31 : vector<2x1xf32> to vector<2x128xf32>
    %33 = arith.addf %30, %32 : vector<2x128xf32>
    %cst_29 = arith.constant dense<0xFF800000> : vector<128xf32>
    %34 = vector.multi_reduction <maximumf>, %33, %cst_29 [0] : vector<2x128xf32> to vector<128xf32>
    %35 = vector.shape_cast %34 : vector<128xf32> to vector<1x128xf32>
    %36 = vector.broadcast %35 : vector<1x128xf32> to vector<2x128xf32>
    %37 = arith.subf %33, %36 : vector<2x128xf32>
    %38 = math.exp %37 : vector<2x128xf32>
    %cst_30 = arith.constant dense<0.000000e+00> : vector<128xf32>
    %39 = vector.multi_reduction <add>, %38, %cst_30 [0] : vector<2x128xf32> to vector<128xf32>
    %40 = vector.shape_cast %39 : vector<128xf32> to vector<1x128xf32>
    %41 = vector.broadcast %40 : vector<1x128xf32> to vector<2x128xf32>
    %42 = arith.divf %38, %41 : vector<2x128xf32>
    %c0_31 = arith.constant 0 : index
    %c0_32 = arith.constant 0 : index
    %43 = vector.load %arg12[%c0_31, %c0_32] : memref<2x128xf32, #tpu.memory_space<vmem>>, vector<2x128xf32>
    tpu.vector_store %arg12[%c0_31, %c0_32], %42 {strides = array<i32>} : memref<2x128xf32, #tpu.memory_space<vmem>>, vector<2x128xf32>,
    return
  }
  func.func @transform_0(%arg0: i32) -> (i32, i32) {
    %c0_i32 = arith.constant 0 : i32
    %c0_i32_0 = arith.constant 0 : i32
    return %c0_i32, %arg0 : i32, i32
  }
  func.func @transform_1(%arg0: i32) -> (i32, i32) {
    %c0_i32 = arith.constant 0 : i32
    %c0_i32_0 = arith.constant 0 : i32
    %c0_i32_1 = arith.constant 0 : i32
    return %c0_i32, %c0_i32_0 : i32, i32
  }
  func.func @transform_2(%arg0: i32) -> (i32, i32) {
    %c0_i32 = arith.constant 0 : i32
    %c0_i32_0 = arith.constant 0 : i32
    %c0_i32_1 = arith.constant 0 : i32
    return %c0_i32, %c0_i32_0 : i32, i32
  }
  func.func @transform_3(%arg0: i32) -> (i32, i32) {
    %c0_i32 = arith.constant 0 : i32
    %c0_i32_0 = arith.constant 0 : i32
    %c0_i32_1 = arith.constant 0 : i32
    return %c0_i32, %c0_i32_0 : i32, i32
  }
  func.func @transform_4(%arg0: i32) -> (i32, i32) {
    %c0_i32 = arith.constant 0 : i32
    %c0_i32_0 = arith.constant 0 : i32
    %c0_i32_1 = arith.constant 0 : i32
    return %c0_i32, %c0_i32_0 : i32, i32
  }
  func.func @transform_5(%arg0: i32) -> (i32, i32) {
    %c0_i32 = arith.constant 0 : i32
    %c0_i32_0 = arith.constant 0 : i32
    %c0_i32_1 = arith.constant 0 : i32
    return %c0_i32, %c0_i32_0 : i32, i32
  }
  func.func @transform_6(%arg0: i32) -> (i32, i32) {
    %c0_i32 = arith.constant 0 : i32
    %c0_i32_0 = arith.constant 0 : i32
    %c0_i32_1 = arith.constant 0 : i32
    return %c0_i32, %c0_i32_0 : i32, i32
  }
  func.func @transform_7(%arg0: i32) -> (i32, i32) {
    %c0_i32 = arith.constant 0 : i32
    %c0_i32_0 = arith.constant 0 : i32
    %c0_i32_1 = arith.constant 0 : i32
    return %c0_i32, %c0_i32_0 : i32, i32
  }
  func.func @transform_8(%arg0: i32) -> (i32, i32) {
    %c0_i32 = arith.constant 0 : i32
    %c0_i32_0 = arith.constant 0 : i32
    %c0_i32_1 = arith.constant 0 : i32
    return %c0_i32, %c0_i32_0 : i32, i32
  }
  func.func @transform_9(%arg0: i32) -> (i32, i32) {
    %c0_i32 = arith.constant 0 : i32
    %c0_i32_0 = arith.constant 0 : i32
    %c0_i32_1 = arith.constant 0 : i32
    return %c0_i32, %c0_i32_0 : i32, i32
  }
  func.func @transform_10(%arg0: i32) -> (i32, i32) {
    %c0_i32 = arith.constant 0 : i32
    %c0_i32_0 = arith.constant 0 : i32
    %c0_i32_1 = arith.constant 0 : i32
    return %c0_i32, %c0_i32_0 : i32, i32
  }
  func.func @transform_11(%arg0: i32) -> (i32, i32) {
    %c0_i32 = arith.constant 0 : i32
    %c0_i32_0 = arith.constant 0 : i32
    return %c0_i32, %arg0 : i32, i32
  }
}

</mosaic_0001>

<llo_original>
// kernel: tpu_custom_call.1
$region0: #{tpu_custom_call.1}
  #allocation0 [shape = 'u32[]', space=smem, size = 0x4, offset = 0x4, fixed_abs, tag = 'smem constant byte address 0x4 - core index']
  #allocation1 [shape = 'u32[144,128]{1,0:T(1,128)}', space=vmem, size = 0x12000, scoped, tag = 'internal scratch']
  %s0 = inlined_call_operand.vmem [shape: f32[90,128], index: 0, kind: input, shape index: {}]
  %s1 = inlined_call_operand.vmem [shape: f32[330,90], index: 1, kind: input, shape index: {}]
  %s2 = inlined_call_operand.vmem [shape: f32[330,1], index: 2, kind: input, shape index: {}]
  %s3 = inlined_call_operand.vmem [shape: f32[70,330], index: 3, kind: input, shape index: {}]
  %s4 = inlined_call_operand.vmem [shape: f32[70,1], index: 4, kind: input, shape index: {}]
  %s5 = inlined_call_operand.vmem [shape: f32[25,70], index: 5, kind: input, shape index: {}]
  %s6 = inlined_call_operand.vmem [shape: f32[25,1], index: 6, kind: input, shape index: {}]
  %s7 = inlined_call_operand.vmem [shape: f32[5,25], index: 7, kind: input, shape index: {}]
  %s8 = inlined_call_operand.vmem [shape: f32[5,1], index: 8, kind: input, shape index: {}]
  %s9 = inlined_call_operand.vmem [shape: f32[2,5], index: 9, kind: input, shape index: {}]
  %s10 = inlined_call_operand.vmem [shape: f32[2,1], index: 10, kind: input, shape index: {}]
  %s11 = inlined_call_operand.hbm [shape: f32[2,128], index: 11, kind: output, shape index: {}]
  %s12 = sld [smem:[#allocation0]]
  $region54: #{tpu_custom_call.1} parent=0
    _
  %s14 = ssub.s32 1, %s12
  %s15 = scalar_select 0, %s14, %s12
  $region1: #{tpu_custom_call.1} parent=0
    #allocation2 [shape = 'u8[1024]{0}', space=vmem, size = 0x400, scoped, tag = 'output window, operand 0, single buffered']
    #allocation3 [shape = 's32[1]{0}', space=sflag, size = 0x4, scoped, tag = 'scoped memory for tpu_custom_call.1']
    %16 = vsyncpa [#allocation3], 0
    // Predicated region
    $region2: #{tpu_custom_call.1} parent=1 // pred_check
      _
    $region3: #{tpu_custom_call.1} parent=1 // pred_check_branch
      %18 = sbr.rel (0) target = $region5
    $region4: #{tpu_custom_call.1} parent=1 // pred_region
      _
    $region5: #{tpu_custom_call.1} parent=1 // pred_fallthru
      _
    // Predicated region
    $region6: #{tpu_custom_call.1} parent=1 // pred_check
      _
    $region7: #{tpu_custom_call.1} parent=1 // pred_check_branch
      %20 = sbr.rel (0) target = $region9
    $region8: #{tpu_custom_call.1} parent=1 // pred_region
      _
    $region9: #{tpu_custom_call.1} parent=1 // pred_fallthru
      _
    // Predicated region
    $region10: #{tpu_custom_call.1} parent=1 // pred_check
      _
    $region11: #{tpu_custom_call.1} parent=1 // pred_check_branch
      %22 = sbr.rel (0) target = $region13
    $region12: #{tpu_custom_call.1} parent=1 // pred_region
      _
    $region13: #{tpu_custom_call.1} parent=1 // pred_fallthru
      _
    // Predicated region
    $region14: #{tpu_custom_call.1} parent=1 // pred_check
      _
    $region15: #{tpu_custom_call.1} parent=1 // pred_check_branch
      %24 = sbr.rel (0) target = $region17
    $region16: #{tpu_custom_call.1} parent=1 // pred_region
      _
    $region17: #{tpu_custom_call.1} parent=1 // pred_fallthru
      _
    // Predicated region
    $region18: #{tpu_custom_call.1} parent=1 // pred_check
      _
    $region19: #{tpu_custom_call.1} parent=1 // pred_check_branch
      %26 = sbr.rel (0) target = $region21
    $region20: #{tpu_custom_call.1} parent=1 // pred_region
      _
    $region21: #{tpu_custom_call.1} parent=1 // pred_fallthru
      _
    // Predicated region
    $region22: #{tpu_custom_call.1} parent=1 // pred_check
      _
    $region23: #{tpu_custom_call.1} parent=1 // pred_check_branch
      %28 = sbr.rel (0) target = $region25
    $region24: #{tpu_custom_call.1} parent=1 // pred_region
      _
    $region25: #{tpu_custom_call.1} parent=1 // pred_fallthru
      _
    // Predicated region
    $region26: #{tpu_custom_call.1} parent=1 // pred_check
      _
    $region27: #{tpu_custom_call.1} parent=1 // pred_check_branch
      %30 = sbr.rel (0) target = $region29
    $region28: #{tpu_custom_call.1} parent=1 // pred_region
      _
    $region29: #{tpu_custom_call.1} parent=1 // pred_fallthru
      _
    // Predicated region
    $region30: #{tpu_custom_call.1} parent=1 // pred_check
      _
    $region31: #{tpu_custom_call.1} parent=1 // pred_check_branch
      %32 = sbr.rel (0) target = $region33
    $region32: #{tpu_custom_call.1} parent=1 // pred_region
      _
    $region33: #{tpu_custom_call.1} parent=1 // pred_fallthru
      _
    // Predicated region
    $region34: #{tpu_custom_call.1} parent=1 // pred_check
      _
    $region35: #{tpu_custom_call.1} parent=1 // pred_check_branch
      %34 = sbr.rel (0) target = $region37
    $region36: #{tpu_custom_call.1} parent=1 // pred_region
      _
    $region37: #{tpu_custom_call.1} parent=1 // pred_fallthru
      _
    // Predicated region
    $region38: #{tpu_custom_call.1} parent=1 // pred_check
      _
    $region39: #{tpu_custom_call.1} parent=1 // pred_check_branch
      %36 = sbr.rel (0) target = $region41
    $region40: #{tpu_custom_call.1} parent=1 // pred_region
      _
    $region41: #{tpu_custom_call.1} parent=1 // pred_fallthru
      _
    // Predicated region
    $region42: #{tpu_custom_call.1} parent=1 // pred_check
      _
    $region43: #{tpu_custom_call.1} parent=1 // pred_check_branch
      %38 = sbr.rel (0) target = $region45
    $region44: #{tpu_custom_call.1} parent=1 // pred_region
      _
    $region45: #{tpu_custom_call.1} parent=1 // pred_fallthru
      _
    %v39 = vld [vmem:[%s0] sm:$0xff]
    %v40 = vld [vmem:[%s0 + $0x8] sm:$0xff]
    %v41 = vld [vmem:[%s0 + $0x10] sm:$0xff]
    %v42 = vld [vmem:[%s0 + $0x18] sm:$0xff]
    %v43 = vld [vmem:[%s0 + $0x20] sm:$0xff]
    %v44 = vld [vmem:[%s0 + $0x28] sm:$0xff]
    %v45 = vld [vmem:[%s0 + $0x30] sm:$0xff]
    %v46 = vld [vmem:[%s0 + $0x38] sm:$0xff]
    %v47 = vld [vmem:[%s0 + $0x40] sm:$0xff]
    %v48 = vld [vmem:[%s0 + $0x48] sm:$0xff]
    %v49 = vld [vmem:[%s0 + $0x50] sm:$0xff]
    %v50 = vld [vmem:[%s0 + $0x58] sm:$0x3]
    %v51 = vld [vmem:[%s1] sm:$0xff]
    %v52 = vld [vmem:[%s1 + $0x8] sm:$0xff]
    %v53 = vld [vmem:[%s1 + $0x10] sm:$0xff]
    %v54 = vld [vmem:[%s1 + $0x18] sm:$0xff]
    %v55 = vld [vmem:[%s1 + $0x20] sm:$0xff]
    %v56 = vld [vmem:[%s1 + $0x28] sm:$0xff]
    %v57 = vld [vmem:[%s1 + $0x30] sm:$0xff]
    %v58 = vld [vmem:[%s1 + $0x38] sm:$0xff]
    %v59 = vld [vmem:[%s1 + $0x40] sm:$0xff]
    %v60 = vld [vmem:[%s1 + $0x48] sm:$0xff]
    %v61 = vld [vmem:[%s1 + $0x50] sm:$0xff]
    %v62 = vld [vmem:[%s1 + $0x58] sm:$0xff]
    %v63 = vld [vmem:[%s1 + $0x60] sm:$0xff]
    %v64 = vld [vmem:[%s1 + $0x68] sm:$0xff]
    %v65 = vld [vmem:[%s1 + $0x70] sm:$0xff]
    %v66 = vld [vmem:[%s1 + $0x78] sm:$0xff]
    %v67 = vld [vmem:[%s1 + $0x80] sm:$0xff]
    %v68 = vld [vmem:[%s1 + $0x88] sm:$0xff]
    %v69 = vld [vmem:[%s1 + $0x90] sm:$0xff]
    %v70 = vld [vmem:[%s1 + $0x98] sm:$0xff]
    %v71 = vld [vmem:[%s1 + $0xa0] sm:$0xff]
    %v72 = vld [vmem:[%s1 + $0xa8] sm:$0xff]
    %v73 = vld [vmem:[%s1 + $0xb0] sm:$0xff]
    %v74 = vld [vmem:[%s1 + $0xb8] sm:$0xff]
    %v75 = vld [vmem:[%s1 + $0xc0] sm:$0xff]
    %v76 = vld [vmem:[%s1 + $0xc8] sm:$0xff]
    %v77 = vld [vmem:[%s1 + $0xd0] sm:$0xff]
    %v78 = vld [vmem:[%s1 + $0xd8] sm:$0xff]
    %v79 = vld [vmem:[%s1 + $0xe0] sm:$0xff]
    %v80 = vld [vmem:[%s1 + $0xe8] sm:$0xff]
    %v81 = vld [vmem:[%s1 + $0xf0] sm:$0xff]
    %v82 = vld [vmem:[%s1 + $0xf8] sm:$0xff]
    %v83 = vld [vmem:[%s1 + $0x100] sm:$0xff]
    %v84 = vld [vmem:[%s1 + $0x108] sm:$0xff]
    %v85 = vld [vmem:[%s1 + $0x110] sm:$0xff]
    %v86 = vld [vmem:[%s1 + $0x118] sm:$0xff]
    %v87 = vld [vmem:[%s1 + $0x120] sm:$0xff]
    %v88 = vld [vmem:[%s1 + $0x128] sm:$0xff]
    %v89 = vld [vmem:[%s1 + $0x130] sm:$0xff]
    %v90 = vld [vmem:[%s1 + $0x138] sm:$0xff]
    %v91 = vld [vmem:[%s1 + $0x140] sm:$0xff]
    %v92 = vld [vmem:[%s1 + $0x148] sm:$0x3]
    %v93 = vld [vmem:[%s2] sm:$0xff]
    %v94 = vld [vmem:[%s2 + $0x8] sm:$0xff]
    %v95 = vld [vmem:[%s2 + $0x10] sm:$0xff]
    %v96 = vld [vmem:[%s2 + $0x18] sm:$0xff]
    %v97 = vld [vmem:[%s2 + $0x20] sm:$0xff]
    %v98 = vld [vmem:[%s2 + $0x28] sm:$0xff]
    %v99 = vld [vmem:[%s2 + $0x30] sm:$0xff]
    %v100 = vld [vmem:[%s2 + $0x38] sm:$0xff]
    %v101 = vld [vmem:[%s2 + $0x40] sm:$0xff]
    %v102 = vld [vmem:[%s2 + $0x48] sm:$0xff]
    %v103 = vld [vmem:[%s2 + $0x50] sm:$0xff]
    %v104 = vld [vmem:[%s2 + $0x58] sm:$0xff]
    %v105 = vld [vmem:[%s2 + $0x60] sm:$0xff]
    %v106 = vld [vmem:[%s2 + $0x68] sm:$0xff]
    %v107 = vld [vmem:[%s2 + $0x70] sm:$0xff]
    %v108 = vld [vmem:[%s2 + $0x78] sm:$0xff]
    %v109 = vld [vmem:[%s2 + $0x80] sm:$0xff]
    %v110 = vld [vmem:[%s2 + $0x88] sm:$0xff]
    %v111 = vld [vmem:[%s2 + $0x90] sm:$0xff]
    %v112 = vld [vmem:[%s2 + $0x98] sm:$0xff]
    %v113 = vld [vmem:[%s2 + $0xa0] sm:$0xff]
    %v114 = vld [vmem:[%s2 + $0xa8] sm:$0xff]
    %v115 = vld [vmem:[%s2 + $0xb0] sm:$0xff]
    %v116 = vld [vmem:[%s2 + $0xb8] sm:$0xff]
    %v117 = vld [vmem:[%s2 + $0xc0] sm:$0xff]
    %v118 = vld [vmem:[%s2 + $0xc8] sm:$0xff]
    %v119 = vld [vmem:[%s2 + $0xd0] sm:$0xff]
    %v120 = vld [vmem:[%s2 + $0xd8] sm:$0xff]
    %v121 = vld [vmem:[%s2 + $0xe0] sm:$0xff]
    %v122 = vld [vmem:[%s2 + $0xe8] sm:$0xff]
    %v123 = vld [vmem:[%s2 + $0xf0] sm:$0xff]
    %v124 = vld [vmem:[%s2 + $0xf8] sm:$0xff]
    %v125 = vld [vmem:[%s2 + $0x100] sm:$0xff]
    %v126 = vld [vmem:[%s2 + $0x108] sm:$0xff]
    %v127 = vld [vmem:[%s2 + $0x110] sm:$0xff]
    %v128 = vld [vmem:[%s2 + $0x118] sm:$0xff]
    %v129 = vld [vmem:[%s2 + $0x120] sm:$0xff]
    %v130 = vld [vmem:[%s2 + $0x128] sm:$0xff]
    %v131 = vld [vmem:[%s2 + $0x130] sm:$0xff]
    %v132 = vld [vmem:[%s2 + $0x138] sm:$0xff]
    %v133 = vld [vmem:[%s2 + $0x140] sm:$0xff]
    %v134 = vld [vmem:[%s2 + $0x148] sm:$0x3]
    %136 = vset.pattern.permute.xlu0 0
    %137 = vperm.xlu0 %136, %v93
    %v138 = vpop.permute.xlu0 %137
    %141 = vset.pattern.permute.xlu0 0
    %142 = vperm.xlu0 %141, %v94
    %v143 = vpop.permute.xlu0 %142
    %146 = vset.pattern.permute.xlu0 0
    %147 = vperm.xlu0 %146, %v95
    %v148 = vpop.permute.xlu0 %147
    %151 = vset.pattern.permute.xlu0 0
    %152 = vperm.xlu0 %151, %v96
    %v153 = vpop.permute.xlu0 %152
    %156 = vset.pattern.permute.xlu0 0
    %157 = vperm.xlu0 %156, %v97
    %v158 = vpop.permute.xlu0 %157
    %161 = vset.pattern.permute.xlu0 0
    %162 = vperm.xlu0 %161, %v98
    %v163 = vpop.permute.xlu0 %162
    %166 = vset.pattern.permute.xlu0 0
    %167 = vperm.xlu0 %166, %v99
    %v168 = vpop.permute.xlu0 %167
    %171 = vset.pattern.permute.xlu0 0
    %172 = vperm.xlu0 %171, %v100
    %v173 = vpop.permute.xlu0 %172
    %176 = vset.pattern.permute.xlu0 0
    %177 = vperm.xlu0 %176, %v101
    %v178 = vpop.permute.xlu0 %177
    %181 = vset.pattern.permute.xlu0 0
    %182 = vperm.xlu0 %181, %v102
    %v183 = vpop.permute.xlu0 %182
    %186 = vset.pattern.permute.xlu0 0
    %187 = vperm.xlu0 %186, %v103
    %v188 = vpop.permute.xlu0 %187
    %191 = vset.pattern.permute.xlu0 0
    %192 = vperm.xlu0 %191, %v104
    %v193 = vpop.permute.xlu0 %192
    %196 = vset.pattern.permute.xlu0 0
    %197 = vperm.xlu0 %196, %v105
    %v198 = vpop.permute.xlu0 %197
    %201 = vset.pattern.permute.xlu0 0
    %202 = vperm.xlu0 %201, %v106
    %v203 = vpop.permute.xlu0 %202
    %206 = vset.pattern.permute.xlu0 0
    %207 = vperm.xlu0 %206, %v107
    %v208 = vpop.permute.xlu0 %207
    %211 = vset.pattern.permute.xlu0 0
    %212 = vperm.xlu0 %211, %v108
    %v213 = vpop.permute.xlu0 %212
    %216 = vset.pattern.permute.xlu0 0
    %217 = vperm.xlu0 %216, %v109
    %v218 = vpop.permute.xlu0 %217
    %221 = vset.pattern.permute.xlu0 0
    %222 = vperm.xlu0 %221, %v110
    %v223 = vpop.permute.xlu0 %222
    %226 = vset.pattern.permute.xlu0 0
    %227 = vperm.xlu0 %226, %v111
    %v228 = vpop.permute.xlu0 %227
    %231 = vset.pattern.permute.xlu0 0
    %232 = vperm.xlu0 %231, %v112
    %v233 = vpop.permute.xlu0 %232
    %236 = vset.pattern.permute.xlu0 0
    %237 = vperm.xlu0 %236, %v113
    %v238 = vpop.permute.xlu0 %237
    %241 = vset.pattern.permute.xlu0 0
    %242 = vperm.xlu0 %241, %v114
    %v243 = vpop.permute.xlu0 %242
    %246 = vset.pattern.permute.xlu0 0
    %247 = vperm.xlu0 %246, %v115
    %v248 = vpop.permute.xlu0 %247
    %251 = vset.pattern.permute.xlu0 0
    %252 = vperm.xlu0 %251, %v116
    %v253 = vpop.permute.xlu0 %252
    %256 = vset.pattern.permute.xlu0 0
    %257 = vperm.xlu0 %256, %v117
    %v258 = vpop.permute.xlu0 %257
    %261 = vset.pattern.permute.xlu0 0
    %262 = vperm.xlu0 %261, %v118
    %v263 = vpop.permute.xlu0 %262
    %266 = vset.pattern.permute.xlu0 0
    %267 = vperm.xlu0 %266, %v119
    %v268 = vpop.permute.xlu0 %267
    %271 = vset.pattern.permute.xlu0 0
    %272 = vperm.xlu0 %271, %v120
    %v273 = vpop.permute.xlu0 %272
    %276 = vset.pattern.permute.xlu0 0
    %277 = vperm.xlu0 %276, %v121
    %v278 = vpop.permute.xlu0 %277
    %281 = vset.pattern.permute.xlu0 0
    %282 = vperm.xlu0 %281, %v122
    %v283 = vpop.permute.xlu0 %282
    %286 = vset.pattern.permute.xlu0 0
    %287 = vperm.xlu0 %286, %v123
    %v288 = vpop.permute.xlu0 %287
    %291 = vset.pattern.permute.xlu0 0
    %292 = vperm.xlu0 %291, %v124
    %v293 = vpop.permute.xlu0 %292
    %296 = vset.pattern.permute.xlu0 0
    %297 = vperm.xlu0 %296, %v125
    %v298 = vpop.permute.xlu0 %297
    %301 = vset.pattern.permute.xlu0 0
    %302 = vperm.xlu0 %301, %v126
    %v303 = vpop.permute.xlu0 %302
    %306 = vset.pattern.permute.xlu0 0
    %307 = vperm.xlu0 %306, %v127
    %v308 = vpop.permute.xlu0 %307
    %311 = vset.pattern.permute.xlu0 0
    %312 = vperm.xlu0 %311, %v128
    %v313 = vpop.permute.xlu0 %312
    %316 = vset.pattern.permute.xlu0 0
    %317 = vperm.xlu0 %316, %v129
    %v318 = vpop.permute.xlu0 %317
    %321 = vset.pattern.permute.xlu0 0
    %322 = vperm.xlu0 %321, %v130
    %v323 = vpop.permute.xlu0 %322
    %326 = vset.pattern.permute.xlu0 0
    %327 = vperm.xlu0 %326, %v131
    %v328 = vpop.permute.xlu0 %327
    %331 = vset.pattern.permute.xlu0 0
    %332 = vperm.xlu0 %331, %v132
    %v333 = vpop.permute.xlu0 %332
    %336 = vset.pattern.permute.xlu0 0
    %337 = vperm.xlu0 %336, %v133
    %v338 = vpop.permute.xlu0 %337
    %341 = vset.pattern.permute.xlu0 0
    %342 = vperm.xlu0 %341, %v134
    %v343 = vpop.permute.xlu0 %342
    %vm345 = vcmask 736256
    %v347 = vsel %vm345, %v51, 0
    %v350 = vsel %vm345, %v52, 0
    %v353 = vsel %vm345, %v53, 0
    %v356 = vsel %vm345, %v54, 0
    %v359 = vsel %vm345, %v55, 0
    %v362 = vsel %vm345, %v56, 0
    %v365 = vsel %vm345, %v57, 0
    %v368 = vsel %vm345, %v58, 0
    %v371 = vsel %vm345, %v59, 0
    %v374 = vsel %vm345, %v60, 0
    %v377 = vsel %vm345, %v61, 0
    %v380 = vsel %vm345, %v62, 0
    %v383 = vsel %vm345, %v63, 0
    %v386 = vsel %vm345, %v64, 0
    %v389 = vsel %vm345, %v65, 0
    %v392 = vsel %vm345, %v66, 0
    %v395 = vsel %vm345, %v67, 0
    %v398 = vsel %vm345, %v68, 0
    %v401 = vsel %vm345, %v69, 0
    %v404 = vsel %vm345, %v70, 0
    %v407 = vsel %vm345, %v71, 0
    %v410 = vsel %vm345, %v72, 0
    %v413 = vsel %vm345, %v73, 0
    %v416 = vsel %vm345, %v74, 0
    %v419 = vsel %vm345, %v75, 0
    %v422 = vsel %vm345, %v76, 0
    %v425 = vsel %vm345, %v77, 0
    %v428 = vsel %vm345, %v78, 0
    %v431 = vsel %vm345, %v79, 0
    %v434 = vsel %vm345, %v80, 0
    %v437 = vsel %vm345, %v81, 0
    %v440 = vsel %vm345, %v82, 0
    %v443 = vsel %vm345, %v83, 0
    %v446 = vsel %vm345, %v84, 0
    %v449 = vsel %vm345, %v85, 0
    %v452 = vsel %vm345, %v86, 0
    %v455 = vsel %vm345, %v87, 0
    %v458 = vsel %vm345, %v88, 0
    %v461 = vsel %vm345, %v89, 0
    %v464 = vsel %vm345, %v90, 0
    %v467 = vsel %vm345, %v91, 0
    %v470 = vsel %vm345, %v92, 0
    %vm472 = vcmask 1041408
    %v474 = vsel %vm472, %v50, 0
    %476 = vmatprep.subr.mxu0 0.0
    %477 = vmatpush1.msra.mxu0 %v39
    %478 = vmatprep.subr.mxu0 0.0
    %479 = vmatpush1.msra.mxu0 %v40
    %480 = vmatprep.subr.mxu0 0.0
    %481 = vmatpush1.msra.mxu0 %v41
    %482 = vmatprep.subr.mxu0 0.0
    %483 = vmatpush1.msra.mxu0 %v42
    %484 = vmatprep.subr.mxu0 0.0
    %485 = vmatpush1.msra.mxu0 %v43
    %486 = vmatprep.subr.mxu0 0.0
    %487 = vmatpush1.msra.mxu0 %v44
    %488 = vmatprep.subr.mxu0 0.0
    %489 = vmatpush1.msra.mxu0 %v45
    %490 = vmatprep.subr.mxu0 0.0
    %491 = vmatpush1.msra.mxu0 %v46
    %492 = vmatprep.subr.mxu0 0.0
    %493 = vmatpush1.msra.mxu0 %v47
    %494 = vmatprep.subr.mxu0 0.0
    %495 = vmatpush1.msra.mxu0 %v48
    %496 = vmatprep.subr.mxu0 0.0
    %497 = vmatpush1.msra.mxu0 %v49
    %498 = vmatprep.subr.mxu0 0.0
    %499 = vmatpush1.msra.mxu0 %v474
    %500 = vmatprep.subr.mxu0 0.0
    %501 = vmatpush1.msra.mxu0 0.0
    %502 = vmatprep.subr.mxu0 0.0
    %503 = vmatpush1.msra.mxu0 0.0
    %504 = vmatprep.subr.mxu0 0.0
    %505 = vmatpush1.msra.mxu0 0.0
    %506 = vmatprep.subr.mxu0 0.0
    %507 = vmatpush1.msra.mxu0 0.0
    %508 = vmatprep.subr.mxu0 0.0
    %509 = vmatpush1.msra.mxu0 0.0
    %510 = vmatprep.subr.mxu0 0.0
    %511 = vmatpush1.msra.mxu0 0.0
    %512 = vmatprep.subr.mxu0 0.0
    %513 = vmatpush1.msra.mxu0 0.0
    %514 = vmatprep.subr.mxu0 0.0
    %515 = vmatpush1.msra.mxu0 0.0
    %516 = vmatprep.subr.mxu0 0.0
    %517 = vmatpush1.msra.mxu0 0.0
    %518 = vmatprep.subr.mxu0 0.0
    %519 = vmatpush1.msra.mxu0 0.0
    %520 = vmatprep.subr.mxu0 0.0
    %521 = vmatpush1.msra.mxu0 0.0
    %522 = vmatprep.subr.mxu0 0.0
    %523 = vmatpush1.msra.mxu0 0.0
    %524 = vmatprep.subr.mxu0 0.0
    %525 = vmatpush1.msra.mxu0 0.0
    %526 = vmatprep.subr.mxu0 0.0
    %527 = vmatpush1.msra.mxu0 0.0
    %528 = vmatprep.subr.mxu0 0.0
    %529 = vmatpush1.msra.mxu0 0.0
    %530 = vmatprep.subr.mxu0 0.0
    %531 = vmatpush1.msra.mxu0 0.0
    %532 = vmatprep.subr.mxu0 0.0
    %533 = vmatpush1.msra.mxu0 0.0
    %534 = vmatprep.subr.mxu0 0.0
    %535 = vmatpush1.msra.mxu0 0.0
    %536 = vmatprep.subr.mxu0 0.0
    %537 = vmatpush1.msra.mxu0 0.0
    %538 = vmatprep.subr.mxu0 0.0
    %539 = vmatpush1.msra.mxu0 0.0
    %540 = vmatprep.mubr.f32.mxu0 0.0
    %541 = vmatmul.mubr.f32.gmra.mrb[0].mxu0 %v347
    %v542 = vpop.f32.mrb[0].mxu0
    %v543 = vadd.f32 %v138, %v542
    %v544 = vpop.f32.mrb[0].mxu0
    %545 = vmatprep.mubr.f32.mxu0 0.0
    %546 = vmatmul.mubr.f32.gmra.mrb[0].mxu0 %v350
    %v547 = vpop.f32.mrb[0].mxu0
    %v548 = vadd.f32 %v143, %v547
    %v549 = vpop.f32.mrb[0].mxu0
    %550 = vmatprep.mubr.f32.mxu0 0.0
    %551 = vmatmul.mubr.f32.gmra.mrb[0].mxu0 %v353
    %v552 = vpop.f32.mrb[0].mxu0
    %v553 = vadd.f32 %v148, %v552
    %v554 = vpop.f32.mrb[0].mxu0
    %555 = vmatprep.mubr.f32.mxu0 0.0
    %556 = vmatmul.mubr.f32.gmra.mrb[0].mxu0 %v356
    %v557 = vpop.f32.mrb[0].mxu0
    %v558 = vadd.f32 %v153, %v557
    %v559 = vpop.f32.mrb[0].mxu0
    %560 = vmatprep.mubr.f32.mxu0 0.0
    %561 = vmatmul.mubr.f32.gmra.mrb[0].mxu0 %v359
    %v562 = vpop.f32.mrb[0].mxu0
    %v563 = vadd.f32 %v158, %v562
    %v564 = vpop.f32.mrb[0].mxu0
    %565 = vmatprep.mubr.f32.mxu0 0.0
    %566 = vmatmul.mubr.f32.gmra.mrb[0].mxu0 %v362
    %v567 = vpop.f32.mrb[0].mxu0
    %v568 = vadd.f32 %v163, %v567
    %v569 = vpop.f32.mrb[0].mxu0
    %570 = vmatprep.mubr.f32.mxu0 0.0
    %571 = vmatmul.mubr.f32.gmra.mrb[0].mxu0 %v365
    %v572 = vpop.f32.mrb[0].mxu0
    %v573 = vadd.f32 %v168, %v572
    %v574 = vpop.f32.mrb[0].mxu0
    %575 = vmatprep.mubr.f32.mxu0 0.0
    %576 = vmatmul.mubr.f32.gmra.mrb[0].mxu0 %v368
    %v577 = vpop.f32.mrb[0].mxu0
    %v578 = vadd.f32 %v173, %v577
    %v579 = vpop.f32.mrb[0].mxu0
    %580 = vmatprep.mubr.f32.mxu0 0.0
    %581 = vmatmul.mubr.f32.gmra.mrb[0].mxu0 %v371
    %v582 = vpop.f32.mrb[0].mxu0
    %v583 = vadd.f32 %v178, %v582
    %v584 = vpop.f32.mrb[0].mxu0
    %585 = vmatprep.mubr.f32.mxu0 0.0
    %586 = vmatmul.mubr.f32.gmra.mrb[0].mxu0 %v374
    %v587 = vpop.f32.mrb[0].mxu0
    %v588 = vadd.f32 %v183, %v587
    %v589 = vpop.f32.mrb[0].mxu0
    %590 = vmatprep.mubr.f32.mxu0 0.0
    %591 = vmatmul.mubr.f32.gmra.mrb[0].mxu0 %v377
    %v592 = vpop.f32.mrb[0].mxu0
    %v593 = vadd.f32 %v188, %v592
    %v594 = vpop.f32.mrb[0].mxu0
    %595 = vmatprep.mubr.f32.mxu0 0.0
    %596 = vmatmul.mubr.f32.gmra.mrb[0].mxu0 %v380
    %v597 = vpop.f32.mrb[0].mxu0
    %v598 = vadd.f32 %v193, %v597
    %v599 = vpop.f32.mrb[0].mxu0
    %600 = vmatprep.mubr.f32.mxu0 0.0
    %601 = vmatmul.mubr.f32.gmra.mrb[0].mxu0 %v383
    %v602 = vpop.f32.mrb[0].mxu0
    %v603 = vadd.f32 %v198, %v602
    %v604 = vpop.f32.mrb[0].mxu0
    %605 = vmatprep.mubr.f32.mxu0 0.0
    %606 = vmatmul.mubr.f32.gmra.mrb[0].mxu0 %v386
    %v607 = vpop.f32.mrb[0].mxu0
    %v608 = vadd.f32 %v203, %v607
    %v609 = vpop.f32.mrb[0].mxu0
    %610 = vmatprep.mubr.f32.mxu0 0.0
    %611 = vmatmul.mubr.f32.gmra.mrb[0].mxu0 %v389
    %v612 = vpop.f32.mrb[0].mxu0
    %v613 = vadd.f32 %v208, %v612
    %v614 = vpop.f32.mrb[0].mxu0
    %615 = vmatprep.mubr.f32.mxu0 0.0
    %616 = vmatmul.mubr.f32.gmra.mrb[0].mxu0 %v392
    %v617 = vpop.f32.mrb[0].mxu0
    %v618 = vadd.f32 %v213, %v617
    %v619 = vpop.f32.mrb[0].mxu0
    %620 = vmatprep.mubr.f32.mxu0 0.0
    %621 = vmatmul.mubr.f32.gmra.mrb[0].mxu0 %v395
    %v622 = vpop.f32.mrb[0].mxu0
    %v623 = vadd.f32 %v218, %v622
    %v624 = vpop.f32.mrb[0].mxu0
    %625 = vmatprep.mubr.f32.mxu0 0.0
    %626 = vmatmul.mubr.f32.gmra.mrb[0].mxu0 %v398
    %v627 = vpop.f32.mrb[0].mxu0
    %v628 = vadd.f32 %v223, %v627
    %v629 = vpop.f32.mrb[0].mxu0
    %630 = vmatprep.mubr.f32.mxu0 0.0
    %631 = vmatmul.mubr.f32.gmra.mrb[0].mxu0 %v401
    %v632 = vpop.f32.mrb[0].mxu0
    %v633 = vadd.f32 %v228, %v632
    %v634 = vpop.f32.mrb[0].mxu0
    %635 = vmatprep.mubr.f32.mxu0 0.0
    %636 = vmatmul.mubr.f32.gmra.mrb[0].mxu0 %v404
    %v637 = vpop.f32.mrb[0].mxu0
    %v638 = vadd.f32 %v233, %v637
    %v639 = vpop.f32.mrb[0].mxu0
    %640 = vmatprep.mubr.f32.mxu0 0.0
    %641 = vmatmul.mubr.f32.gmra.mrb[0].mxu0 %v407
    %v642 = vpop.f32.mrb[0].mxu0
    %v643 = vadd.f32 %v238, %v642
    %v644 = vpop.f32.mrb[0].mxu0
    %645 = vmatprep.mubr.f32.mxu0 0.0
    %646 = vmatmul.mubr.f32.gmra.mrb[0].mxu0 %v410
    %v647 = vpop.f32.mrb[0].mxu0
    %v648 = vadd.f32 %v243, %v647
    %v649 = vpop.f32.mrb[0].mxu0
    %650 = vmatprep.mubr.f32.mxu0 0.0
    %651 = vmatmul.mubr.f32.gmra.mrb[0].mxu0 %v413
    %v652 = vpop.f32.mrb[0].mxu0
    %v653 = vadd.f32 %v248, %v652
    %v654 = vpop.f32.mrb[0].mxu0
    %655 = vmatprep.mubr.f32.mxu0 0.0
    %656 = vmatmul.mubr.f32.gmra.mrb[0].mxu0 %v416
    %v657 = vpop.f32.mrb[0].mxu0
    %v658 = vadd.f32 %v253, %v657
    %v659 = vpop.f32.mrb[0].mxu0
    %660 = vmatprep.mubr.f32.mxu0 0.0
    %661 = vmatmul.mubr.f32.gmra.mrb[0].mxu0 %v419
    %v662 = vpop.f32.mrb[0].mxu0
    %v663 = vadd.f32 %v258, %v662
    %v664 = vpop.f32.mrb[0].mxu0
    %665 = vmatprep.mubr.f32.mxu0 0.0
    %666 = vmatmul.mubr.f32.gmra.mrb[0].mxu0 %v422
    %v667 = vpop.f32.mrb[0].mxu0
    %v668 = vadd.f32 %v263, %v667
    %v669 = vpop.f32.mrb[0].mxu0
    %670 = vmatprep.mubr.f32.mxu0 0.0
    %671 = vmatmul.mubr.f32.gmra.mrb[0].mxu0 %v425
    %v672 = vpop.f32.mrb[0].mxu0
    %v673 = vadd.f32 %v268, %v672
    %v674 = vpop.f32.mrb[0].mxu0
    %675 = vmatprep.mubr.f32.mxu0 0.0
    %676 = vmatmul.mubr.f32.gmra.mrb[0].mxu0 %v428
    %v677 = vpop.f32.mrb[0].mxu0
    %v678 = vadd.f32 %v273, %v677
    %v679 = vpop.f32.mrb[0].mxu0
    %680 = vmatprep.mubr.f32.mxu0 0.0
    %681 = vmatmul.mubr.f32.gmra.mrb[0].mxu0 %v431
    %v682 = vpop.f32.mrb[0].mxu0
    %v683 = vadd.f32 %v278, %v682
    %v684 = vpop.f32.mrb[0].mxu0
    %685 = vmatprep.mubr.f32.mxu0 0.0
    %686 = vmatmul.mubr.f32.gmra.mrb[0].mxu0 %v434
    %v687 = vpop.f32.mrb[0].mxu0
    %v688 = vadd.f32 %v283, %v687
    %v689 = vpop.f32.mrb[0].mxu0
    %690 = vmatprep.mubr.f32.mxu0 0.0
    %691 = vmatmul.mubr.f32.gmra.mrb[0].mxu0 %v437
    %v692 = vpop.f32.mrb[0].mxu0
    %v693 = vadd.f32 %v288, %v692
    %v694 = vpop.f32.mrb[0].mxu0
    %695 = vmatprep.mubr.f32.mxu0 0.0
    %696 = vmatmul.mubr.f32.gmra.mrb[0].mxu0 %v440
    %v697 = vpop.f32.mrb[0].mxu0
    %v698 = vadd.f32 %v293, %v697
    %v699 = vpop.f32.mrb[0].mxu0
    %700 = vmatprep.mubr.f32.mxu0 0.0
    %701 = vmatmul.mubr.f32.gmra.mrb[0].mxu0 %v443
    %v702 = vpop.f32.mrb[0].mxu0
    %v703 = vadd.f32 %v298, %v702
    %v704 = vpop.f32.mrb[0].mxu0
    %705 = vmatprep.mubr.f32.mxu0 0.0
    %706 = vmatmul.mubr.f32.gmra.mrb[0].mxu0 %v446
    %v707 = vpop.f32.mrb[0].mxu0
    %v708 = vadd.f32 %v303, %v707
    %v709 = vpop.f32.mrb[0].mxu0
    %710 = vmatprep.mubr.f32.mxu0 0.0
    %711 = vmatmul.mubr.f32.gmra.mrb[0].mxu0 %v449
    %v712 = vpop.f32.mrb[0].mxu0
    %v713 = vadd.f32 %v308, %v712
    %v714 = vpop.f32.mrb[0].mxu0
    %715 = vmatprep.mubr.f32.mxu0 0.0
    %716 = vmatmul.mubr.f32.gmra.mrb[0].mxu0 %v452
    %v717 = vpop.f32.mrb[0].mxu0
    %v718 = vadd.f32 %v313, %v717
    %v719 = vpop.f32.mrb[0].mxu0
    %720 = vmatprep.mubr.f32.mxu0 0.0
    %721 = vmatmul.mubr.f32.gmra.mrb[0].mxu0 %v455
    %v722 = vpop.f32.mrb[0].mxu0
    %v723 = vadd.f32 %v318, %v722
    %v724 = vpop.f32.mrb[0].mxu0
    %725 = vmatprep.mubr.f32.mxu0 0.0
    %726 = vmatmul.mubr.f32.gmra.mrb[0].mxu0 %v458
    %v727 = vpop.f32.mrb[0].mxu0
    %v728 = vadd.f32 %v323, %v727
    %v729 = vpop.f32.mrb[0].mxu0
    %730 = vmatprep.mubr.f32.mxu0 0.0
    %731 = vmatmul.mubr.f32.gmra.mrb[0].mxu0 %v461
    %v732 = vpop.f32.mrb[0].mxu0
    %v733 = vadd.f32 %v328, %v732
    %v734 = vpop.f32.mrb[0].mxu0
    %735 = vmatprep.mubr.f32.mxu0 0.0
    %736 = vmatmul.mubr.f32.gmra.mrb[0].mxu0 %v464
    %v737 = vpop.f32.mrb[0].mxu0
    %v738 = vadd.f32 %v333, %v737
    %v739 = vpop.f32.mrb[0].mxu0
    %740 = vmatprep.mubr.f32.mxu0 0.0
    %741 = vmatmul.mubr.f32.gmra.mrb[0].mxu0 %v467
    %v742 = vpop.f32.mrb[0].mxu0
    %v743 = vadd.f32 %v338, %v742
    %v744 = vpop.f32.mrb[0].mxu0
    %745 = vmatprep.mubr.f32.mxu0 0.0
    %746 = vmatmul.mubr.f32.gmra.mrb[0].mxu0 %v470
    %v747 = vpop.f32.mrb[0].mxu0
    %v748 = vadd.f32 %v343, %v747
    %v749 = vpop.f32.mrb[0].mxu0
    %750 = vdwg.mxu0
    %v751 = vmax.f32 %v543, 0.0
    %v752 = vmax.f32 %v548, 0.0
    %v753 = vmax.f32 %v553, 0.0
    %v754 = vmax.f32 %v558, 0.0
    %v755 = vmax.f32 %v563, 0.0
    %v756 = vmax.f32 %v568, 0.0
    %v757 = vmax.f32 %v573, 0.0
    %v758 = vmax.f32 %v578, 0.0
    %v759 = vmax.f32 %v583, 0.0
    %v760 = vmax.f32 %v588, 0.0
    %v761 = vmax.f32 %v593, 0.0
    %v762 = vmax.f32 %v598, 0.0
    %v763 = vmax.f32 %v603, 0.0
    %v764 = vmax.f32 %v608, 0.0
    %v765 = vmax.f32 %v613, 0.0
    %v766 = vmax.f32 %v618, 0.0
    %v767 = vmax.f32 %v623, 0.0
    %v768 = vmax.f32 %v628, 0.0
    %v769 = vmax.f32 %v633, 0.0
    %v770 = vmax.f32 %v638, 0.0
    %v771 = vmax.f32 %v643, 0.0
    %v772 = vmax.f32 %v648, 0.0
    %v773 = vmax.f32 %v653, 0.0
    %v774 = vmax.f32 %v658, 0.0
    %v775 = vmax.f32 %v663, 0.0
    %v776 = vmax.f32 %v668, 0.0
    %v777 = vmax.f32 %v673, 0.0
    %v778 = vmax.f32 %v678, 0.0
    %v779 = vmax.f32 %v683, 0.0
    %v780 = vmax.f32 %v688, 0.0
    %v781 = vmax.f32 %v693, 0.0
    %v782 = vmax.f32 %v698, 0.0
    %v783 = vmax.f32 %v703, 0.0
    %v784 = vmax.f32 %v708, 0.0
    %v785 = vmax.f32 %v713, 0.0
    %v786 = vmax.f32 %v718, 0.0
    %v787 = vmax.f32 %v723, 0.0
    %v788 = vmax.f32 %v728, 0.0
    %v789 = vmax.f32 %v733, 0.0
    %v790 = vmax.f32 %v738, 0.0
    %v791 = vmax.f32 %v743, 0.0
    %v792 = vmax.f32 %v748, 0.0
    %v793 = vld [vmem:[%s3] sm:$0xff]
    %v794 = vld [vmem:[%s3 + $0x8] sm:$0xff]
    %v795 = vld [vmem:[%s3 + $0x10] sm:$0xff]
    %v796 = vld [vmem:[%s3 + $0x18] sm:$0xff]
    %v797 = vld [vmem:[%s3 + $0x20] sm:$0xff]
    %v798 = vld [vmem:[%s3 + $0x28] sm:$0xff]
    %v799 = vld [vmem:[%s3 + $0x30] sm:$0xff]
    %v800 = vld [vmem:[%s3 + $0x38] sm:$0xff]
    %v801 = vld [vmem:[%s3 + $0x40] sm:$0xff]
    %v802 = vld [vmem:[%s3 + $0x48] sm:$0xff]
    %v803 = vld [vmem:[%s3 + $0x50] sm:$0xff]
    %v804 = vld [vmem:[%s3 + $0x58] sm:$0xff]
    %v805 = vld [vmem:[%s3 + $0x60] sm:$0xff]
    %v806 = vld [vmem:[%s3 + $0x68] sm:$0xff]
    %v807 = vld [vmem:[%s3 + $0x70] sm:$0xff]
    %v808 = vld [vmem:[%s3 + $0x78] sm:$0xff]
    %v809 = vld [vmem:[%s3 + $0x80] sm:$0xff]
    %v810 = vld [vmem:[%s3 + $0x88] sm:$0xff]
    %v811 = vld [vmem:[%s3 + $0x90] sm:$0xff]
    %v812 = vld [vmem:[%s3 + $0x98] sm:$0xff]
    %v813 = vld [vmem:[%s3 + $0xa0] sm:$0xff]
    %v814 = vld [vmem:[%s3 + $0xa8] sm:$0xff]
    %v815 = vld [vmem:[%s3 + $0xb0] sm:$0xff]
    %v816 = vld [vmem:[%s3 + $0xb8] sm:$0xff]
    %v817 = vld [vmem:[%s3 + $0xc0] sm:$0x3f]
    %v818 = vld [vmem:[%s3 + $0xc8] sm:$0x3f]
    %v819 = vld [vmem:[%s3 + $0xd0] sm:$0x3f]
    %v820 = vld [vmem:[%s4] sm:$0xff]
    %v821 = vld [vmem:[%s4 + $0x8] sm:$0xff]
    %v822 = vld [vmem:[%s4 + $0x10] sm:$0xff]
    %v823 = vld [vmem:[%s4 + $0x18] sm:$0xff]
    %v824 = vld [vmem:[%s4 + $0x20] sm:$0xff]
    %v825 = vld [vmem:[%s4 + $0x28] sm:$0xff]
    %v826 = vld [vmem:[%s4 + $0x30] sm:$0xff]
    %v827 = vld [vmem:[%s4 + $0x38] sm:$0xff]
    %v828 = vld [vmem:[%s4 + $0x40] sm:$0x3f]
    %830 = vset.pattern.permute.xlu0 0
    %831 = vperm.xlu0 %830, %v820
    %v832 = vpop.permute.xlu0 %831
    %835 = vset.pattern.permute.xlu0 0
    %836 = vperm.xlu0 %835, %v821
    %v837 = vpop.permute.xlu0 %836
    %840 = vset.pattern.permute.xlu0 0
    %841 = vperm.xlu0 %840, %v822
    %v842 = vpop.permute.xlu0 %841
    %845 = vset.pattern.permute.xlu0 0
    %846 = vperm.xlu0 %845, %v823
    %v847 = vpop.permute.xlu0 %846
    %850 = vset.pattern.permute.xlu0 0
    %851 = vperm.xlu0 %850, %v824
    %v852 = vpop.permute.xlu0 %851
    %855 = vset.pattern.permute.xlu0 0
    %856 = vperm.xlu0 %855, %v825
    %v857 = vpop.permute.xlu0 %856
    %860 = vset.pattern.permute.xlu0 0
    %861 = vperm.xlu0 %860, %v826
    %v862 = vpop.permute.xlu0 %861
    %865 = vset.pattern.permute.xlu0 0
    %866 = vperm.xlu0 %865, %v827
    %v867 = vpop.permute.xlu0 %866
    %870 = vset.pattern.permute.xlu0 0
    %871 = vperm.xlu0 %870, %v828
    %v872 = vpop.permute.xlu0 %871
    %vm874 = vcmask 605184
    %v876 = vsel %vm874, %v795, 0
    %v879 = vsel %vm874, %v798, 0
    %v882 = vsel %vm874, %v801, 0
    %v885 = vsel %vm874, %v804, 0
    %v888 = vsel %vm874, %v807, 0
    %v891 = vsel %vm874, %v810, 0
    %v894 = vsel %vm874, %v813, 0
    %v897 = vsel %vm874, %v816, 0
    %v900 = vsel %vm874, %v819, 0
    %v903 = vsel %vm472, %v792, 0
    %905 = vmatprep.subr.mxu0 0.0
    %906 = vmatpush1.msra.mxu0 %v751
    %907 = vmatprep.subr.mxu0 0.0
    %908 = vmatpush1.msra.mxu0 %v752
    %909 = vmatprep.subr.mxu0 0.0
    %910 = vmatpush1.msra.mxu0 %v753
    %911 = vmatprep.subr.mxu0 0.0
    %912 = vmatpush1.msra.mxu0 %v754
    %913 = vmatprep.subr.mxu0 0.0
    %914 = vmatpush1.msra.mxu0 %v755
    %915 = vmatprep.subr.mxu0 0.0
    %916 = vmatpush1.msra.mxu0 %v756
    %917 = vmatprep.subr.mxu0 0.0
    %918 = vmatpush1.msra.mxu0 %v757
    %919 = vmatprep.subr.mxu0 0.0
    %920 = vmatpush1.msra.mxu0 %v758
    %921 = vmatprep.subr.mxu0 0.0
    %922 = vmatpush1.msra.mxu0 %v759
    %923 = vmatprep.subr.mxu0 0.0
    %924 = vmatpush1.msra.mxu0 %v760
    %925 = vmatprep.subr.mxu0 0.0
    %926 = vmatpush1.msra.mxu0 %v761
    %927 = vmatprep.subr.mxu0 0.0
    %928 = vmatpush1.msra.mxu0 %v762
    %929 = vmatprep.subr.mxu0 0.0
    %930 = vmatpush1.msra.mxu0 %v763
    %931 = vmatprep.subr.mxu0 0.0
    %932 = vmatpush1.msra.mxu0 %v764
    %933 = vmatprep.subr.mxu0 0.0
    %934 = vmatpush1.msra.mxu0 %v765
    %935 = vmatprep.subr.mxu0 0.0
    %936 = vmatpush1.msra.mxu0 %v766
    %937 = vmatprep.subr.mxu0 0.0
    %938 = vmatpush1.msra.mxu0 %v767
    %939 = vmatprep.subr.mxu0 0.0
    %940 = vmatpush1.msra.mxu0 %v768
    %941 = vmatprep.subr.mxu0 0.0
    %942 = vmatpush1.msra.mxu0 %v769
    %943 = vmatprep.subr.mxu0 0.0
    %944 = vmatpush1.msra.mxu0 %v770
    %945 = vmatprep.subr.mxu0 0.0
    %946 = vmatpush1.msra.mxu0 %v771
    %947 = vmatprep.subr.mxu0 0.0
    %948 = vmatpush1.msra.mxu0 %v772
    %949 = vmatprep.subr.mxu0 0.0
    %950 = vmatpush1.msra.mxu0 %v773
    %951 = vmatprep.subr.mxu0 0.0
    %952 = vmatpush1.msra.mxu0 %v774
    %953 = vmatprep.subr.mxu0 0.0
    %954 = vmatpush1.msra.mxu0 %v775
    %955 = vmatprep.subr.mxu0 0.0
    %956 = vmatpush1.msra.mxu0 %v776
    %957 = vmatprep.subr.mxu0 0.0
    %958 = vmatpush1.msra.mxu0 %v777
    %959 = vmatprep.subr.mxu0 0.0
    %960 = vmatpush1.msra.mxu0 %v778
    %961 = vmatprep.subr.mxu0 0.0
    %962 = vmatpush1.msra.mxu0 %v779
    %963 = vmatprep.subr.mxu0 0.0
    %964 = vmatpush1.msra.mxu0 %v780
    %965 = vmatprep.subr.mxu0 0.0
    %966 = vmatpush1.msra.mxu0 %v781
    %967 = vmatprep.subr.mxu0 0.0
    %968 = vmatpush1.msra.mxu0 %v782
    %969 = vmatprep.mubr.f32.mxu0 %v794
    %970 = vmatmul.mubr.f32.gmra.mrb[0].mxu0 %v793
    %v971 = vpop.f32.mrb[0].mxu0
    %v972 = vadd.f32 %v832, %v971
    %v973 = vpop.f32.mrb[0].mxu0
    %974 = vmatprep.mubr.f32.mxu0 %v797
    %975 = vmatmul.mubr.f32.gmra.mrb[0].mxu0 %v796
    %v976 = vpop.f32.mrb[0].mxu0
    %v977 = vadd.f32 %v837, %v976
    %v978 = vpop.f32.mrb[0].mxu0
    %979 = vmatprep.mubr.f32.mxu0 %v800
    %980 = vmatmul.mubr.f32.gmra.mrb[0].mxu0 %v799
    %v981 = vpop.f32.mrb[0].mxu0
    %v982 = vadd.f32 %v842, %v981
    %v983 = vpop.f32.mrb[0].mxu0
    %984 = vmatprep.mubr.f32.mxu0 %v803
    %985 = vmatmul.mubr.f32.gmra.mrb[0].mxu0 %v802
    %v986 = vpop.f32.mrb[0].mxu0
    %v987 = vadd.f32 %v847, %v986
    %v988 = vpop.f32.mrb[0].mxu0
    %989 = vmatprep.mubr.f32.mxu0 %v806
    %990 = vmatmul.mubr.f32.gmra.mrb[0].mxu0 %v805
    %v991 = vpop.f32.mrb[0].mxu0
    %v992 = vadd.f32 %v852, %v991
    %v993 = vpop.f32.mrb[0].mxu0
    %994 = vmatprep.mubr.f32.mxu0 %v809
    %995 = vmatmul.mubr.f32.gmra.mrb[0].mxu0 %v808
    %v996 = vpop.f32.mrb[0].mxu0
    %v997 = vadd.f32 %v857, %v996
    %v998 = vpop.f32.mrb[0].mxu0
    %999 = vmatprep.mubr.f32.mxu0 %v812
    %1000 = vmatmul.mubr.f32.gmra.mrb[0].mxu0 %v811
    %v1001 = vpop.f32.mrb[0].mxu0
    %v1002 = vadd.f32 %v862, %v1001
    %v1003 = vpop.f32.mrb[0].mxu0
    %1004 = vmatprep.mubr.f32.mxu0 %v815
    %1005 = vmatmul.mubr.f32.gmra.mrb[0].mxu0 %v814
    %v1006 = vpop.f32.mrb[0].mxu0
    %v1007 = vadd.f32 %v867, %v1006
    %v1008 = vpop.f32.mrb[0].mxu0
    %1009 = vmatprep.mubr.f32.mxu0 %v818
    %1010 = vmatmul.mubr.f32.gmra.mrb[0].mxu0 %v817
    %v1011 = vpop.f32.mrb[0].mxu0
    %v1012 = vadd.f32 %v872, %v1011
    %v1013 = vpop.f32.mrb[0].mxu0
    %1014 = vdwg.mxu0
    %1015 = vmatprep.subr.mxu0 0.0
    %1016 = vmatpush1.msra.mxu0 %v783
    %1017 = vmatprep.subr.mxu0 0.0
    %1018 = vmatpush1.msra.mxu0 %v784
    %1019 = vmatprep.subr.mxu0 0.0
    %1020 = vmatpush1.msra.mxu0 %v785
    %1021 = vmatprep.subr.mxu0 0.0
    %1022 = vmatpush1.msra.mxu0 %v786
    %1023 = vmatprep.subr.mxu0 0.0
    %1024 = vmatpush1.msra.mxu0 %v787
    %1025 = vmatprep.subr.mxu0 0.0
    %1026 = vmatpush1.msra.mxu0 %v788
    %1027 = vmatprep.subr.mxu0 0.0
    %1028 = vmatpush1.msra.mxu0 %v789
    %1029 = vmatprep.subr.mxu0 0.0
    %1030 = vmatpush1.msra.mxu0 %v790
    %1031 = vmatprep.subr.mxu0 0.0
    %1032 = vmatpush1.msra.mxu0 %v791
    %1033 = vmatprep.subr.mxu0 0.0
    %1034 = vmatpush1.msra.mxu0 %v903
    %1035 = vmatprep.subr.mxu0 0.0
    %1036 = vmatpush1.msra.mxu0 0.0
    %1037 = vmatprep.subr.mxu0 0.0
    %1038 = vmatpush1.msra.mxu0 0.0
    %1039 = vmatprep.subr.mxu0 0.0
    %1040 = vmatpush1.msra.mxu0 0.0
    %1041 = vmatprep.subr.mxu0 0.0
    %1042 = vmatpush1.msra.mxu0 0.0
    %1043 = vmatprep.subr.mxu0 0.0
    %1044 = vmatpush1.msra.mxu0 0.0
    %1045 = vmatprep.subr.mxu0 0.0
    %1046 = vmatpush1.msra.mxu0 0.0
    %1047 = vmatprep.subr.mxu0 0.0
    %1048 = vmatpush1.msra.mxu0 0.0
    %1049 = vmatprep.subr.mxu0 0.0
    %1050 = vmatpush1.msra.mxu0 0.0
    %1051 = vmatprep.subr.mxu0 0.0
    %1052 = vmatpush1.msra.mxu0 0.0
    %1053 = vmatprep.subr.mxu0 0.0
    %1054 = vmatpush1.msra.mxu0 0.0
    %1055 = vmatprep.subr.mxu0 0.0
    %1056 = vmatpush1.msra.mxu0 0.0
    %1057 = vmatprep.subr.mxu0 0.0
    %1058 = vmatpush1.msra.mxu0 0.0
    %1059 = vmatprep.subr.mxu0 0.0
    %1060 = vmatpush1.msra.mxu0 0.0
    %1061 = vmatprep.subr.mxu0 0.0
    %1062 = vmatpush1.msra.mxu0 0.0
    %1063 = vmatprep.subr.mxu0 0.0
    %1064 = vmatpush1.msra.mxu0 0.0
    %1065 = vmatprep.subr.mxu0 0.0
    %1066 = vmatpush1.msra.mxu0 0.0
    %1067 = vmatprep.subr.mxu0 0.0
    %1068 = vmatpush1.msra.mxu0 0.0
    %1069 = vmatprep.subr.mxu0 0.0
    %1070 = vmatpush1.msra.mxu0 0.0
    %1071 = vmatprep.subr.mxu0 0.0
    %1072 = vmatpush1.msra.mxu0 0.0
    %1073 = vmatprep.subr.mxu0 0.0
    %1074 = vmatpush1.msra.mxu0 0.0
    %1075 = vmatprep.subr.mxu0 0.0
    %1076 = vmatpush1.msra.mxu0 0.0
    %1077 = vmatprep.subr.mxu0 0.0
    %1078 = vmatpush1.msra.mxu0 0.0
    %1079 = vmatprep.mubr.f32.mxu0 0.0
    %1080 = vmatmul.mubr.f32.gmra.mrb[0].mxu0 %v876
    %v1081 = vpop.f32.mrb[0].mxu0
    %v1082 = vadd.f32 %v972, %v1081
    %v1083 = vpop.f32.mrb[0].mxu0
    %1084 = vmatprep.mubr.f32.mxu0 0.0
    %1085 = vmatmul.mubr.f32.gmra.mrb[0].mxu0 %v879
    %v1086 = vpop.f32.mrb[0].mxu0
    %v1087 = vadd.f32 %v977, %v1086
    %v1088 = vpop.f32.mrb[0].mxu0
    %1089 = vmatprep.mubr.f32.mxu0 0.0
    %1090 = vmatmul.mubr.f32.gmra.mrb[0].mxu0 %v882
    %v1091 = vpop.f32.mrb[0].mxu0
    %v1092 = vadd.f32 %v982, %v1091
    %v1093 = vpop.f32.mrb[0].mxu0
    %1094 = vmatprep.mubr.f32.mxu0 0.0
    %1095 = vmatmul.mubr.f32.gmra.mrb[0].mxu0 %v885
    %v1096 = vpop.f32.mrb[0].mxu0
    %v1097 = vadd.f32 %v987, %v1096
    %v1098 = vpop.f32.mrb[0].mxu0
    %1099 = vmatprep.mubr.f32.mxu0 0.0
    %1100 = vmatmul.mubr.f32.gmra.mrb[0].mxu0 %v888
    %v1101 = vpop.f32.mrb[0].mxu0
    %v1102 = vadd.f32 %v992, %v1101
    %v1103 = vpop.f32.mrb[0].mxu0
    %1104 = vmatprep.mubr.f32.mxu0 0.0
    %1105 = vmatmul.mubr.f32.gmra.mrb[0].mxu0 %v891
    %v1106 = vpop.f32.mrb[0].mxu0
    %v1107 = vadd.f32 %v997, %v1106
    %v1108 = vpop.f32.mrb[0].mxu0
    %1109 = vmatprep.mubr.f32.mxu0 0.0
    %1110 = vmatmul.mubr.f32.gmra.mrb[0].mxu0 %v894
    %v1111 = vpop.f32.mrb[0].mxu0
    %v1112 = vadd.f32 %v1002, %v1111
    %v1113 = vpop.f32.mrb[0].mxu0
    %1114 = vmatprep.mubr.f32.mxu0 0.0
    %1115 = vmatmul.mubr.f32.gmra.mrb[0].mxu0 %v897
    %v1116 = vpop.f32.mrb[0].mxu0
    %v1117 = vadd.f32 %v1007, %v1116
    %v1118 = vpop.f32.mrb[0].mxu0
    %1119 = vmatprep.mubr.f32.mxu0 0.0
    %1120 = vmatmul.mubr.f32.gmra.mrb[0].mxu0 %v900
    %v1121 = vpop.f32.mrb[0].mxu0
    %v1122 = vadd.f32 %v1012, %v1121
    %v1123 = vpop.f32.mrb[0].mxu0
    %1124 = vdwg.mxu0
    %v1125 = vmax.f32 %v1082, 0.0
    %v1126 = vmax.f32 %v1087, 0.0
    %v1127 = vmax.f32 %v1092, 0.0
    %v1128 = vmax.f32 %v1097, 0.0
    %v1129 = vmax.f32 %v1102, 0.0
    %v1130 = vmax.f32 %v1107, 0.0
    %v1131 = vmax.f32 %v1112, 0.0
    %v1132 = vmax.f32 %v1117, 0.0
    %v1133 = vmax.f32 %v1122, 0.0
    %v1134 = vld [vmem:[%s5] sm:$0xff]
    %v1135 = vld [vmem:[%s5 + $0x8] sm:$0xff]
    %v1136 = vld [vmem:[%s5 + $0x10] sm:$0xff]
    %v1137 = vld [vmem:[%s5 + $0x18] sm:$0x1]
    %v1138 = vld [vmem:[%s6] sm:$0xff]
    %v1139 = vld [vmem:[%s6 + $0x8] sm:$0xff]
    %v1140 = vld [vmem:[%s6 + $0x10] sm:$0xff]
    %v1141 = vld [vmem:[%s6 + $0x18] sm:$0x1]
    %1143 = vset.pattern.permute.xlu0 0
    %1144 = vperm.xlu0 %1143, %v1138
    %v1145 = vpop.permute.xlu0 %1144
    %1148 = vset.pattern.permute.xlu0 0
    %1149 = vperm.xlu0 %1148, %v1139
    %v1150 = vpop.permute.xlu0 %1149
    %1153 = vset.pattern.permute.xlu0 0
    %1154 = vperm.xlu0 %1153, %v1140
    %v1155 = vpop.permute.xlu0 %1154
    %1158 = vset.pattern.permute.xlu0 0
    %1159 = vperm.xlu0 %1158, %v1141
    %v1160 = vpop.permute.xlu0 %1159
    %vm1162 = vcmask 572416
    %v1164 = vsel %vm1162, %v1134, 0
    %v1167 = vsel %vm1162, %v1135, 0
    %v1170 = vsel %vm1162, %v1136, 0
    %v1173 = vsel %vm1162, %v1137, 0
    %vm1175 = vcmask 1045504
    %v1177 = vsel %vm1175, %v1133, 0
    %1179 = vmatprep.subr.mxu0 0.0
    %1180 = vmatpush1.msra.mxu0 %v1125
    %1181 = vmatprep.subr.mxu0 0.0
    %1182 = vmatpush1.msra.mxu0 %v1126
    %1183 = vmatprep.subr.mxu0 0.0
    %1184 = vmatpush1.msra.mxu0 %v1127
    %1185 = vmatprep.subr.mxu0 0.0
    %1186 = vmatpush1.msra.mxu0 %v1128
    %1187 = vmatprep.subr.mxu0 0.0
    %1188 = vmatpush1.msra.mxu0 %v1129
    %1189 = vmatprep.subr.mxu0 0.0
    %1190 = vmatpush1.msra.mxu0 %v1130
    %1191 = vmatprep.subr.mxu0 0.0
    %1192 = vmatpush1.msra.mxu0 %v1131
    %1193 = vmatprep.subr.mxu0 0.0
    %1194 = vmatpush1.msra.mxu0 %v1132
    %1195 = vmatprep.subr.mxu0 0.0
    %1196 = vmatpush1.msra.mxu0 %v1177
    %1197 = vmatprep.subr.mxu0 0.0
    %1198 = vmatpush1.msra.mxu0 0.0
    %1199 = vmatprep.subr.mxu0 0.0
    %1200 = vmatpush1.msra.mxu0 0.0
    %1201 = vmatprep.subr.mxu0 0.0
    %1202 = vmatpush1.msra.mxu0 0.0
    %1203 = vmatprep.subr.mxu0 0.0
    %1204 = vmatpush1.msra.mxu0 0.0
    %1205 = vmatprep.subr.mxu0 0.0
    %1206 = vmatpush1.msra.mxu0 0.0
    %1207 = vmatprep.subr.mxu0 0.0
    %1208 = vmatpush1.msra.mxu0 0.0
    %1209 = vmatprep.subr.mxu0 0.0
    %1210 = vmatpush1.msra.mxu0 0.0
    %1211 = vmatprep.subr.mxu0 0.0
    %1212 = vmatpush1.msra.mxu0 0.0
    %1213 = vmatprep.subr.mxu0 0.0
    %1214 = vmatpush1.msra.mxu0 0.0
    %1215 = vmatprep.subr.mxu0 0.0
    %1216 = vmatpush1.msra.mxu0 0.0
    %1217 = vmatprep.subr.mxu0 0.0
    %1218 = vmatpush1.msra.mxu0 0.0
    %1219 = vmatprep.subr.mxu0 0.0
    %1220 = vmatpush1.msra.mxu0 0.0
    %1221 = vmatprep.subr.mxu0 0.0
    %1222 = vmatpush1.msra.mxu0 0.0
    %1223 = vmatprep.subr.mxu0 0.0
    %1224 = vmatpush1.msra.mxu0 0.0
    %1225 = vmatprep.subr.mxu0 0.0
    %1226 = vmatpush1.msra.mxu0 0.0
    %1227 = vmatprep.subr.mxu0 0.0
    %1228 = vmatpush1.msra.mxu0 0.0
    %1229 = vmatprep.subr.mxu0 0.0
    %1230 = vmatpush1.msra.mxu0 0.0
    %1231 = vmatprep.subr.mxu0 0.0
    %1232 = vmatpush1.msra.mxu0 0.0
    %1233 = vmatprep.subr.mxu0 0.0
    %1234 = vmatpush1.msra.mxu0 0.0
    %1235 = vmatprep.subr.mxu0 0.0
    %1236 = vmatpush1.msra.mxu0 0.0
    %1237 = vmatprep.subr.mxu0 0.0
    %1238 = vmatpush1.msra.mxu0 0.0
    %1239 = vmatprep.subr.mxu0 0.0
    %1240 = vmatpush1.msra.mxu0 0.0
    %1241 = vmatprep.subr.mxu0 0.0
    %1242 = vmatpush1.msra.mxu0 0.0
    %1243 = vmatprep.mubr.f32.mxu0 0.0
    %1244 = vmatmul.mubr.f32.gmra.mrb[0].mxu0 %v1164
    %v1245 = vpop.f32.mrb[0].mxu0
    %v1246 = vadd.f32 %v1145, %v1245
    %v1247 = vpop.f32.mrb[0].mxu0
    %1248 = vmatprep.mubr.f32.mxu0 0.0
    %1249 = vmatmul.mubr.f32.gmra.mrb[0].mxu0 %v1167
    %v1250 = vpop.f32.mrb[0].mxu0
    %v1251 = vadd.f32 %v1150, %v1250
    %v1252 = vpop.f32.mrb[0].mxu0
    %1253 = vmatprep.mubr.f32.mxu0 0.0
    %1254 = vmatmul.mubr.f32.gmra.mrb[0].mxu0 %v1170
    %v1255 = vpop.f32.mrb[0].mxu0
    %v1256 = vadd.f32 %v1155, %v1255
    %v1257 = vpop.f32.mrb[0].mxu0
    %1258 = vmatprep.mubr.f32.mxu0 0.0
    %1259 = vmatmul.mubr.f32.gmra.mrb[0].mxu0 %v1173
    %v1260 = vpop.f32.mrb[0].mxu0
    %v1261 = vadd.f32 %v1160, %v1260
    %v1262 = vpop.f32.mrb[0].mxu0
    %1263 = vdwg.mxu0
    %v1264 = vmax.f32 %v1246, 0.0
    %v1265 = vmax.f32 %v1251, 0.0
    %v1266 = vmax.f32 %v1256, 0.0
    %v1267 = vmax.f32 %v1261, 0.0
    %v1268 = vld [vmem:[%s7] sm:$0x1f]
    %v1269 = vld [vmem:[%s8] sm:$0x1f]
    %1271 = vset.pattern.permute.xlu0 0
    %1272 = vperm.xlu0 %1271, %v1269
    %v1273 = vpop.permute.xlu0 %1272
    %vm1275 = vcmask 203776
    %v1277 = vsel %vm1275, %v1268, 0
    %vm1279 = vcmask 1040384
    %v1281 = vsel %vm1279, %v1267, 0
    %1283 = vmatprep.subr.mxu0 0.0
    %1284 = vmatpush1.msra.mxu0 %v1264
    %1285 = vmatprep.subr.mxu0 0.0
    %1286 = vmatpush1.msra.mxu0 %v1265
    %1287 = vmatprep.subr.mxu0 0.0
    %1288 = vmatpush1.msra.mxu0 %v1266
    %1289 = vmatprep.subr.mxu0 0.0
    %1290 = vmatpush1.msra.mxu0 %v1281
    %1291 = vmatprep.subr.mxu0 0.0
    %1292 = vmatpush1.msra.mxu0 0.0
    %1293 = vmatprep.subr.mxu0 0.0
    %1294 = vmatpush1.msra.mxu0 0.0
    %1295 = vmatprep.subr.mxu0 0.0
    %1296 = vmatpush1.msra.mxu0 0.0
    %1297 = vmatprep.subr.mxu0 0.0
    %1298 = vmatpush1.msra.mxu0 0.0
    %1299 = vmatprep.subr.mxu0 0.0
    %1300 = vmatpush1.msra.mxu0 0.0
    %1301 = vmatprep.subr.mxu0 0.0
    %1302 = vmatpush1.msra.mxu0 0.0
    %1303 = vmatprep.subr.mxu0 0.0
    %1304 = vmatpush1.msra.mxu0 0.0
    %1305 = vmatprep.subr.mxu0 0.0
    %1306 = vmatpush1.msra.mxu0 0.0
    %1307 = vmatprep.subr.mxu0 0.0
    %1308 = vmatpush1.msra.mxu0 0.0
    %1309 = vmatprep.subr.mxu0 0.0
    %1310 = vmatpush1.msra.mxu0 0.0
    %1311 = vmatprep.subr.mxu0 0.0
    %1312 = vmatpush1.msra.mxu0 0.0
    %1313 = vmatprep.subr.mxu0 0.0
    %1314 = vmatpush1.msra.mxu0 0.0
    %1315 = vmatprep.subr.mxu0 0.0
    %1316 = vmatpush1.msra.mxu0 0.0
    %1317 = vmatprep.subr.mxu0 0.0
    %1318 = vmatpush1.msra.mxu0 0.0
    %1319 = vmatprep.subr.mxu0 0.0
    %1320 = vmatpush1.msra.mxu0 0.0
    %1321 = vmatprep.subr.mxu0 0.0
    %1322 = vmatpush1.msra.mxu0 0.0
    %1323 = vmatprep.subr.mxu0 0.0
    %1324 = vmatpush1.msra.mxu0 0.0
    %1325 = vmatprep.subr.mxu0 0.0
    %1326 = vmatpush1.msra.mxu0 0.0
    %1327 = vmatprep.subr.mxu0 0.0
    %1328 = vmatpush1.msra.mxu0 0.0
    %1329 = vmatprep.subr.mxu0 0.0
    %1330 = vmatpush1.msra.mxu0 0.0
    %1331 = vmatprep.subr.mxu0 0.0
    %1332 = vmatpush1.msra.mxu0 0.0
    %1333 = vmatprep.subr.mxu0 0.0
    %1334 = vmatpush1.msra.mxu0 0.0
    %1335 = vmatprep.subr.mxu0 0.0
    %1336 = vmatpush1.msra.mxu0 0.0
    %1337 = vmatprep.subr.mxu0 0.0
    %1338 = vmatpush1.msra.mxu0 0.0
    %1339 = vmatprep.subr.mxu0 0.0
    %1340 = vmatpush1.msra.mxu0 0.0
    %1341 = vmatprep.subr.mxu0 0.0
    %1342 = vmatpush1.msra.mxu0 0.0
    %1343 = vmatprep.subr.mxu0 0.0
    %1344 = vmatpush1.msra.mxu0 0.0
    %1345 = vmatprep.subr.mxu0 0.0
    %1346 = vmatpush1.msra.mxu0 0.0
    %1347 = vmatprep.mubr.f32.mxu0 0.0
    %1348 = vmatmul.mubr.f32.gmra.mrb[0].mxu0 %v1277
    %v1349 = vpop.f32.mrb[0].mxu0
    %v1350 = vadd.f32 %v1273, %v1349
    %v1351 = vpop.f32.mrb[0].mxu0
    %1352 = vdwg.mxu0
    %v1353 = vmax.f32 %v1350, 0.0
    %v1354 = vld [vmem:[%s9] sm:$0x3]
    %v1355 = vld [vmem:[%s10] sm:$0x3]
    %1357 = vset.pattern.permute.xlu0 0
    %1358 = vperm.xlu0 %1357, %v1355
    %v1359 = vpop.permute.xlu0 %1358
    %vm1361 = vcmask 39936
    %v1363 = vsel %vm1361, %v1354, 0
    %vm1365 = vcmask 1044480
    %v1367 = vsel %vm1365, %v1353, 0
    %1369 = vmatprep.subr.mxu0 0.0
    %1370 = vmatpush1.msra.mxu0 %v1367
    %1371 = vmatprep.subr.mxu0 0.0
    %1372 = vmatpush1.msra.mxu0 0.0
    %1373 = vmatprep.subr.mxu0 0.0
    %1374 = vmatpush1.msra.mxu0 0.0
    %1375 = vmatprep.subr.mxu0 0.0
    %1376 = vmatpush1.msra.mxu0 0.0
    %1377 = vmatprep.subr.mxu0 0.0
    %1378 = vmatpush1.msra.mxu0 0.0
    %1379 = vmatprep.subr.mxu0 0.0
    %1380 = vmatpush1.msra.mxu0 0.0
    %1381 = vmatprep.subr.mxu0 0.0
    %1382 = vmatpush1.msra.mxu0 0.0
    %1383 = vmatprep.subr.mxu0 0.0
    %1384 = vmatpush1.msra.mxu0 0.0
    %1385 = vmatprep.subr.mxu0 0.0
    %1386 = vmatpush1.msra.mxu0 0.0
    %1387 = vmatprep.subr.mxu0 0.0
    %1388 = vmatpush1.msra.mxu0 0.0
    %1389 = vmatprep.subr.mxu0 0.0
    %1390 = vmatpush1.msra.mxu0 0.0
    %1391 = vmatprep.subr.mxu0 0.0
    %1392 = vmatpush1.msra.mxu0 0.0
    %1393 = vmatprep.subr.mxu0 0.0
    %1394 = vmatpush1.msra.mxu0 0.0
    %1395 = vmatprep.subr.mxu0 0.0
    %1396 = vmatpush1.msra.mxu0 0.0
    %1397 = vmatprep.subr.mxu0 0.0
    %1398 = vmatpush1.msra.mxu0 0.0
    %1399 = vmatprep.subr.mxu0 0.0
    %1400 = vmatpush1.msra.mxu0 0.0
    %1401 = vmatprep.subr.mxu0 0.0
    %1402 = vmatpush1.msra.mxu0 0.0
    %1403 = vmatprep.subr.mxu0 0.0
    %1404 = vmatpush1.msra.mxu0 0.0
    %1405 = vmatprep.subr.mxu0 0.0
    %1406 = vmatpush1.msra.mxu0 0.0
    %1407 = vmatprep.subr.mxu0 0.0
    %1408 = vmatpush1.msra.mxu0 0.0
    %1409 = vmatprep.subr.mxu0 0.0
    %1410 = vmatpush1.msra.mxu0 0.0
    %1411 = vmatprep.subr.mxu0 0.0
    %1412 = vmatpush1.msra.mxu0 0.0
    %1413 = vmatprep.subr.mxu0 0.0
    %1414 = vmatpush1.msra.mxu0 0.0
    %1415 = vmatprep.subr.mxu0 0.0
    %1416 = vmatpush1.msra.mxu0 0.0
    %1417 = vmatprep.subr.mxu0 0.0
    %1418 = vmatpush1.msra.mxu0 0.0
    %1419 = vmatprep.subr.mxu0 0.0
    %1420 = vmatpush1.msra.mxu0 0.0
    %1421 = vmatprep.subr.mxu0 0.0
    %1422 = vmatpush1.msra.mxu0 0.0
    %1423 = vmatprep.subr.mxu0 0.0
    %1424 = vmatpush1.msra.mxu0 0.0
    %1425 = vmatprep.subr.mxu0 0.0
    %1426 = vmatpush1.msra.mxu0 0.0
    %1427 = vmatprep.subr.mxu0 0.0
    %1428 = vmatpush1.msra.mxu0 0.0
    %1429 = vmatprep.subr.mxu0 0.0
    %1430 = vmatpush1.msra.mxu0 0.0
    %1431 = vmatprep.subr.mxu0 0.0
    %1432 = vmatpush1.msra.mxu0 0.0
    %1433 = vmatprep.mubr.f32.mxu0 0.0
    %1434 = vmatmul.mubr.f32.gmra.mrb[0].mxu0 %v1363
    %v1435 = vpop.f32.mrb[0].mxu0
    %v1436 = vadd.f32 %v1359, %v1435
    %v1437 = vpop.f32.mrb[0].mxu0
    %1438 = vdwg.mxu0
    %v1439 = vsel %vm472, %v1436, -inf
    %v1440 = vrot.slane %v1439, 4
    %v1441 = vmax.f32 %v1439, %v1440
    %v1442 = vrot.slane %v1441, 2
    %v1443 = vmax.f32 %v1441, %v1442
    %v1444 = vrot.slane %v1443, 1
    %v1445 = vmax.f32 %v1443, %v1444
    %v1446 = vsub.f32 %v1436, %v1445
    %v1447 = vmul.f32 %v1446, 1.442695
    %v1448 = vpow.pop %v1447
    %v1449 = vsel %vm472, %v1448, 0.0
    %v1450 = vrot.slane %v1449, 4
    %v1451 = vadd.f32 %v1449, %v1450
    %v1452 = vrot.slane %v1451, 2
    %v1453 = vadd.f32 %v1451, %v1452
    %v1454 = vrot.slane %v1453, 1
    %v1455 = vadd.f32 %v1453, %v1454
    %v1456 = vrcp.pop %v1455
    %v1457 = vmul.f32 %v1448, %v1456
    %1458 = vst [vmem:[#allocation2] sm:$0x3] %v1457
    // Predicated region
    $region46: #{tpu_custom_call.1} parent=1 // pred_check
      _
    $region47: #{tpu_custom_call.1} parent=1 // pred_check_branch
      %1460 = sbr.rel (0) target = $region49
    $region48: #{tpu_custom_call.1} parent=1 // pred_region
      %s1462 = ssub.s32 32, 32
      %1463 = vsyncadd [#allocation3], %s1462
      %s1465 = sshll.u32 [#allocation2], 4
      %s1466 = int_to_ptr.vmem [resolvable:$true] %s1465
      %1468 = dma.vmem_to_hbm [thread:$0]  %s1466, 32, %s11, [#allocation3]
    $region49: #{tpu_custom_call.1} parent=1 // pred_fallthru
      _
    // Predicated region
    $region50: #{tpu_custom_call.1} parent=1 // pred_check
      _
    $region51: #{tpu_custom_call.1} parent=1 // pred_check_branch
      %1470 = sbr.rel (0) target = $region53
    $region52: #{tpu_custom_call.1} parent=1 // pred_region
      %1471 = dma.done [#allocation3], 32
    $region53: #{tpu_custom_call.1} parent=1 // pred_fallthru
      _
    %1472 = vsyncpa [#allocation3], 1

</llo_original>
